<compile_context>
chip_gen: v5e
topology: v5e:2x2
jax: 0.10.0
libtpu: 0.0.40
codegen_flags: <defaults>
</compile_context>

<pallas_src>
import math

import jax
import jax.numpy as jnp
from jax import lax
from jax.experimental import pallas as pl
from jax.experimental.pallas import tpu as pltpu


def _round_up(x, m):
    return (x + m - 1) // m * m


def _attention_kernel(*, n_head, d_pad, c_pad, q_tile, kv_tile, seq_len):
    """Per-(batch, query-tile) kernel.  K/V are projected once per batch
    element (at query-tile 0) and cached in bf16 VMEM scratch."""

    def kernel(x_ref, wqkv_ref, bqkv_ref, wo_ref, bo_ref, o_ref,
               k_sc, v_sc, y_sc):
        qi = pl.program_id(1)

        # ---- K / V projection: once per batch element, chunked over T -----
        # Separate K and V matmuls, each cast straight into bf16 scratch, so
        # there is never a (T, 2*Cp) f32 temporary alive.
        @pl.when(qi == 0)
        def _():
            for c in range(seq_len // kv_tile):           # static chunk loop
                r0 = c * kv_tile
                xc = x_ref[0, pl.ds(r0, kv_tile), :]       # (TKV, Cp) bf16
                kc = jnp.dot(xc, wqkv_ref[:, c_pad:2 * c_pad],
                             preferred_element_type=jnp.float32)
                kc = kc + bqkv_ref[0, c_pad:2 * c_pad]
                k_sc[pl.ds(r0, kv_tile), :] = kc.astype(k_sc.dtype)
                vc = jnp.dot(xc, wqkv_ref[:, 2 * c_pad:],
                             preferred_element_type=jnp.float32)
                vc = vc + bqkv_ref[0, 2 * c_pad:]
                v_sc[pl.ds(r0, kv_tile), :] = vc.astype(v_sc.dtype)

        # ---- Q projection for this query tile (scale pre-folded into W_q) --
        q_start = pl.multiple_of(qi * q_tile, q_tile)
        x_t = x_ref[0, pl.ds(q_start, q_tile), :]          # (TQ, Cp) bf16
        q = (jnp.dot(x_t, wqkv_ref[:, :c_pad],
                     preferred_element_type=jnp.float32)
             + bqkv_ref[0, :c_pad]).astype(jnp.bfloat16)   # (TQ, Cp) bf16

        # ---- per-head attention with deferred softmax normalization --------
        contract_last = (((1,), (1,)), ((), ()))           # QK^T without k.T
        for h in range(n_head):                            # static unroll
            lo = h * d_pad
            qh = q[:, lo:lo + d_pad]                       # (TQ, Dp) bf16
            kh = k_sc[:, lo:lo + d_pad]                    # (T,  Dp) bf16
            vh = v_sc[:, lo:lo + d_pad]                    # (T,  Dp) bf16

            att = lax.dot_general(qh, kh, contract_last,
                                  preferred_element_type=jnp.float32)
            # numerically-stable, un-normalized exp (f32 elementwise, v5e-safe)
            att = jnp.exp(att - jnp.max(att, axis=-1, keepdims=True))
            denom = jnp.sum(att, axis=-1, keepdims=True)   # (TQ, 1) f32

            yh = jnp.dot(att.astype(jnp.bfloat16), vh,
                         preferred_element_type=jnp.float32)   # (TQ, Dp) f32
            # normalize the small (TQ, Dp) tile instead of the (TQ, T) probs
            yh = yh * pl.reciprocal(denom, approx=True)
            y_sc[:, lo:lo + d_pad] = yh.astype(y_sc.dtype)

        # ---- single full-Cp output-projection GEMM --------------------------
        out = jnp.dot(y_sc[...], wo_ref[...],
                      preferred_element_type=jnp.float32)
        o_ref[0] = (out + bo_ref[0]).astype(o_ref.dtype)

    return kernel


def self_attention(x, params, n_head):
    """x: (B, T, C) f32; params: weights pre-transposed (in,out), biases (1,out)."""
    B, T, C = x.shape
    assert C % n_head == 0
    D = C // n_head
    scale = 1.0 / math.sqrt(D)

    # ---- pad per-head dim so the channel (lane) dim is a multiple of 128 ----
    lane = 128
    step = lane // math.gcd(n_head, lane)
    Dp = _round_up(D, step)
    Cp = n_head * Dp                      # multiple of 128 by construction

    # ---- query tiling: 256 rows feeds the 256-wide MXU on v6e/v7x ----------
    if T <= 256:
        TQ = T
    elif T % 256 == 0:
        TQ = 256
    else:
        TQ = 128
    assert T % TQ == 0, "T must be a multiple of the query tile"
    num_qt = T // TQ

    # K/V-projection chunk (bounds the live f32 projection tile to O(TKV*Cp))
    TKV = T
    for cand in (512, 256, 128):
        if T > cand and T % cand == 0:
            TKV = cand
            break

    f32, bf16 = jnp.float32, jnp.bfloat16

    def pad_head_cols(w):                 # (C, C) -> (C, Cp), per-head D -> Dp
        w = w.reshape(C, n_head, D)
        w = jnp.pad(w, ((0, 0), (0, 0), (0, Dp - D)))
        return w.reshape(C, Cp)

    def pad_head_bias(b):                 # (1, C) -> (1, Cp)
        b = b.reshape(1, n_head, D)
        b = jnp.pad(b, ((0, 0), (0, 0), (0, Dp - D)))
        return b.reshape(1, Cp)

    # fused QKV weight (Cp, 3*Cp) in bf16, fused bias (1, 3*Cp) in f32.
    # The 1/sqrt(D) scale is folded into the Q slice (weight AND bias) so the
    # kernel never multiplies the (TQ, T) score tile.
    w_qkv = jnp.concatenate([pad_head_cols(params["wq"]) * scale,
                             pad_head_cols(params["wk"]),
                             pad_head_cols(params["wv"])], axis=1)     # (C, 3Cp)
    w_qkv = jnp.pad(w_qkv, ((0, Cp - C), (0, 0))).astype(bf16)         # (Cp, 3Cp)
    b_qkv = jnp.concatenate([pad_head_bias(params["bq"]) * scale,
                             pad_head_bias(params["bk"]),
                             pad_head_bias(params["bv"])], axis=1).astype(f32)

    # output projection: rows follow the head-padded layout, cols padded to Cp
    wo = params["wo"].reshape(n_head, D, C)
    wo = jnp.pad(wo, ((0, 0), (0, Dp - D), (0, Cp - C))).reshape(Cp, Cp)
    wo = wo.astype(bf16)
    bo = jnp.pad(params["bo"], ((0, 0), (0, Cp - C))).astype(f32)

    x_p = jnp.pad(x, ((0, 0), (0, 0), (0, Cp - C))).astype(bf16)       # (B,T,Cp)

    kernel = _attention_kernel(n_head=n_head, d_pad=Dp, c_pad=Cp,
                               q_tile=TQ, kv_tile=TKV, seq_len=T)

    flops = 8 * B * T * Cp * Cp + 4 * B * T * T * Cp
    transcendentals = B * n_head * T * T
    bytes_accessed = (B * T * Cp * 2            # x bf16 in
                      + 4 * Cp * Cp * 2         # weights bf16
                      + 4 * Cp * 4              # biases f32
                      + B * T * Cp * 4)         # out f32

    def build(single_buffer_weights):
        if single_buffer_weights:
            def const_spec(shape):
                return pl.BlockSpec(shape, lambda b, q: (0,) * len(shape),
                                    pipeline_mode=pl.Buffered(1))
        else:
            def const_spec(shape):
                return pl.BlockSpec(shape, lambda b, q: (0,) * len(shape))

        wbuf = 1 if single_buffer_weights else 2
        # footprint: x block (2x buffered), K/V/Y scratch, weights, out block
        # (2x), plus slack for the (TQ, T) f32 score tile and spills.
        vmem_est = (2 * T * Cp * 2 + 2 * T * Cp * 2 + TQ * Cp * 2
                    + wbuf * (4 * Cp * Cp * 2 + 4 * Cp * 4)
                    + 2 * TQ * Cp * 4 + 2 * TQ * T * 4)
        vmem_limit = int(min(max(2 * vmem_est, 32 * 1024 * 1024),
                             96 * 1024 * 1024))

        return pl.pallas_call(
            kernel,
            out_shape=jax.ShapeDtypeStruct((B, T, Cp), f32),
            grid_spec=pltpu.PrefetchScalarGridSpec(
                num_scalar_prefetch=0,
                grid=(B, num_qt),
                in_specs=[
                    pl.BlockSpec((1, T, Cp), lambda b, q: (b, 0, 0)),  # x (full seq)
                    const_spec((Cp, 3 * Cp)),                          # fused W_qkv
                    const_spec((1, 3 * Cp)),                           # fused b_qkv
                    const_spec((Cp, Cp)),                              # W_out
                    const_spec((1, Cp)),                               # b_out
                ],
                out_specs=pl.BlockSpec((1, TQ, Cp), lambda b, q: (b, q, 0)),
                scratch_shapes=[
                    pltpu.VMEM((T, Cp), bf16),    # K cache (across q tiles)
                    pltpu.VMEM((T, Cp), bf16),    # V cache
                    pltpu.VMEM((TQ, Cp), bf16),   # per-head outputs, staged
                ],
            ),
            compiler_params=pltpu.CompilerParams(
                dimension_semantics=("parallel", "arbitrary"),
                vmem_limit_bytes=vmem_limit,
            ),
            cost_estimate=pl.CostEstimate(flops=flops,
                                          transcendentals=transcendentals,
                                          bytes_accessed=bytes_accessed),
        )

    try:
        out_p = jax.block_until_ready(build(True)(x_p, w_qkv, b_qkv, wo, bo))
    except Exception:
        # pl.Buffered(1) single-buffering of constant operands not supported on
        # this jax/Mosaic version; fall back to default double-buffering.
        out_p = jax.block_until_ready(build(False)(x_p, w_qkv, b_qkv, wo, bo))

    return out_p[..., :C] if Cp != C else out_p


def _reference(x, params, n_head):
    """Pure-JAX reference mirroring the PyTorch forward (eval mode) with the
    same bf16-matmul / f32-accumulate precision policy as the kernel."""
    B, T, C = x.shape
    D = C // n_head
    f32, bf16 = jnp.float32, jnp.bfloat16
    xb = x.astype(bf16)

    def proj(w, b):
        return (jnp.einsum("btc,cd->btd", xb, w.astype(bf16),
                           preferred_element_type=f32) + b[0]).astype(bf16)

    q = proj(params["wq"], params["bq"]).reshape(B, T, n_head, D).transpose(0, 2, 1, 3)
    k = proj(params["wk"], params["bk"]).reshape(B, T, n_head, D).transpose(0, 2, 1, 3)
    v = proj(params["wv"], params["bv"]).reshape(B, T, n_head, D).transpose(0, 2, 1, 3)

    att = jnp.einsum("bhtd,bhsd->bhts", q, k,
                     preferred_element_type=f32) * (1.0 / math.sqrt(D))
    att = jax.nn.softmax(att, axis=-1)
    y = jnp.einsum("bhts,bhsd->bhtd", att.astype(bf16), v,
                   preferred_element_type=f32)
    y = y.transpose(0, 2, 1, 3).reshape(B, T, C)
    return (jnp.einsum("btc,cd->btd", y.astype(bf16), params["wo"].astype(bf16),
                       preferred_element_type=f32) + params["bo"][0])


if __name__ == "__main__":
    B, T, C, n_head = 2, 8, 32, 4

    key = jax.random.PRNGKey(0)
    kx, kq, kk, kv, ko, kbq, kbk, kbv, kbo = jax.random.split(key, 9)

    std = 1.0 / math.sqrt(C)
    params = {
        "wq": jax.random.normal(kq, (C, C), jnp.float32) * std,
        "wk": jax.random.normal(kk, (C, C), jnp.float32) * std,
        "wv": jax.random.normal(kv, (C, C), jnp.float32) * std,
        "wo": jax.random.normal(ko, (C, C), jnp.float32) * std,
        "bq": jax.random.normal(kbq, (1, C), jnp.float32) * std,
        "bk": jax.random.normal(kbk, (1, C), jnp.float32) * std,
        "bv": jax.random.normal(kbv, (1, C), jnp.float32) * std,
        "bo": jax.random.normal(kbo, (1, C), jnp.float32) * std,
    }

    x = jax.random.normal(kx, (B, T, C), jnp.float32)

    out = jax.block_until_ready(self_attention(x, params, n_head))
    ref = _reference(x, params, n_head)

    assert out.shape == (B, T, C)
    assert jnp.allclose(out, ref, atol=2e-2, rtol=2e-2), "mismatch vs reference"

    print("KERNEL_OK")
</pallas_src>

<mosaic_0001>
module attributes {stable_mosaic.version = 11 : i64} {
  func.func @kernel(%arg0: i32, %arg1: i32, %arg2: memref<1x8x128xbf16, #tpu.memory_space<vmem>>, %arg3: memref<128x384xbf16, #tpu.memory_space<vmem>>, %arg4: memref<1x384xf32, #tpu.memory_space<vmem>>, %arg5: memref<128x128xbf16, #tpu.memory_space<vmem>>, %arg6: memref<1x128xf32, #tpu.memory_space<vmem>>, %arg7: memref<1x8x128xf32, #tpu.memory_space<vmem>>, %arg8: memref<8x128xbf16, #tpu.memory_space<vmem>>, %arg9: memref<8x128xbf16, #tpu.memory_space<vmem>>, %arg10: memref<8x128xbf16, #tpu.memory_space<vmem>>) attributes {dimension_semantics = [#tpu.dimension_semantics<parallel>, #tpu.dimension_semantics<arbitrary>], iteration_bounds = array<i64: 2, 1>, scalar_prefetch = 0 : i64, scratch_operands = 3 : i64, tpu.core_type = #tpu.core_type<tc>, window_params = [{transform_indices = @transform_0, window_bounds = array<i64: 1, 8, 128>}, {pipeline_mode = #tpu.pipeline_mode<synchronous>, transform_indices = @transform_1, window_bounds = array<i64: 128, 384>}, {pipeline_mode = #tpu.pipeline_mode<synchronous>, transform_indices = @transform_2, window_bounds = array<i64: 1, 384>}, {pipeline_mode = #tpu.pipeline_mode<synchronous>, transform_indices = @transform_3, window_bounds = array<i64: 128, 128>}, {pipeline_mode = #tpu.pipeline_mode<synchronous>, transform_indices = @transform_4, window_bounds = array<i64: 1, 128>}, {transform_indices = @transform_5, window_bounds = array<i64: 1, 8, 128>}]} {
    %c0_i32 = arith.constant 0 : i32
    %0 = arith.cmpi eq, %arg1, %c0_i32 : i32
    %1 = arith.extui %0 : i1 to i32
    %c0_i32_0 = arith.constant 0 : i32
    %2 = arith.cmpi ne, %1, %c0_i32_0 : i32
    scf.if %2 {
      %c0_53 = arith.constant 0 : index
      %c0_54 = arith.constant 0 : index
      %c0_55 = arith.constant 0 : index
      %99 = vector.load %arg2[%c0_53, %c0_54, %c0_55] : memref<1x8x128xbf16, #tpu.memory_space<vmem>>, vector<1x8x128xbf16>
      %100 = vector.shape_cast %99 : vector<1x8x128xbf16> to vector<8x128xbf16>
      %c0_56 = arith.constant 0 : index
      %c128 = arith.constant 128 : index
      %101 = vector.load %arg3[%c0_56, %c128] : memref<128x384xbf16, #tpu.memory_space<vmem>>, vector<128x128xbf16>
      %cst_57 = arith.constant dense<0.000000e+00> : vector<8x128xf32>
      %102 = tpu.matmul %100, %101, %cst_57 {dimension_numbers = #tpu.dot_dimension_numbers<[1], [0], [0], [1], [0, 0, 1, 1], [], []>} : vector<8x128xbf16>, vector<128x128xbf16>, vector<8x128xf32> -> vector<8x128xf32>
      %c0_58 = arith.constant 0 : index
      %c128_59 = arith.constant 128 : index
      %103 = vector.load %arg4[%c0_58, %c128_59] : memref<1x384xf32, #tpu.memory_space<vmem>>, vector<1x128xf32>
      %104 = vector.shape_cast %103 : vector<1x128xf32> to vector<128xf32>
      %105 = vector.shape_cast %104 : vector<128xf32> to vector<1x128xf32>
      %106 = vector.broadcast %105 : vector<1x128xf32> to vector<8x128xf32>
      %107 = arith.addf %102, %106 : vector<8x128xf32>
      %108 = arith.truncf %107 : vector<8x128xf32> to vector<8x128xbf16>
      %c0_60 = arith.constant 0 : index
      %c0_61 = arith.constant 0 : index
      %109 = vector.load %arg8[%c0_60, %c0_61] : memref<8x128xbf16, #tpu.memory_space<vmem>>, vector<8x128xbf16>
      tpu.vector_store %arg8[%c0_60, %c0_61], %108 {strides = array<i32>} : memref<8x128xbf16, #tpu.memory_space<vmem>>, vector<8x128xbf16>,
      %c0_62 = arith.constant 0 : index
      %c256 = arith.constant 256 : index
      %110 = vector.load %arg3[%c0_62, %c256] : memref<128x384xbf16, #tpu.memory_space<vmem>>, vector<128x128xbf16>
      %cst_63 = arith.constant dense<0.000000e+00> : vector<8x128xf32>
      %111 = tpu.matmul %100, %110, %cst_63 {dimension_numbers = #tpu.dot_dimension_numbers<[1], [0], [0], [1], [0, 0, 1, 1], [], []>} : vector<8x128xbf16>, vector<128x128xbf16>, vector<8x128xf32> -> vector<8x128xf32>
      %c0_64 = arith.constant 0 : index
      %c256_65 = arith.constant 256 : index
      %112 = vector.load %arg4[%c0_64, %c256_65] : memref<1x384xf32, #tpu.memory_space<vmem>>, vector<1x128xf32>
      %113 = vector.shape_cast %112 : vector<1x128xf32> to vector<128xf32>
      %114 = vector.shape_cast %113 : vector<128xf32> to vector<1x128xf32>
      %115 = vector.broadcast %114 : vector<1x128xf32> to vector<8x128xf32>
      %116 = arith.addf %111, %115 : vector<8x128xf32>
      %117 = arith.truncf %116 : vector<8x128xf32> to vector<8x128xbf16>
      %c0_66 = arith.constant 0 : index
      %c0_67 = arith.constant 0 : index
      %118 = vector.load %arg9[%c0_66, %c0_67] : memref<8x128xbf16, #tpu.memory_space<vmem>>, vector<8x128xbf16>
      tpu.vector_store %arg9[%c0_66, %c0_67], %117 {strides = array<i32>} : memref<8x128xbf16, #tpu.memory_space<vmem>>, vector<8x128xbf16>,
    } else {
    }
    %c8_i32 = arith.constant 8 : i32
    %3 = arith.muli %arg1, %c8_i32 : i32
    %4 = tpu.assume_multiple %3, 8 : i32
    %c0 = arith.constant 0 : index
    %5 = arith.index_cast %4 : i32 to index
    %c0_1 = arith.constant 0 : index
    %6 = vector.load %arg2[%c0, %5, %c0_1] : memref<1x8x128xbf16, #tpu.memory_space<vmem>>, vector<1x8x128xbf16>
    %7 = vector.shape_cast %6 : vector<1x8x128xbf16> to vector<8x128xbf16>
    %c0_2 = arith.constant 0 : index
    %c0_3 = arith.constant 0 : index
    %8 = vector.load %arg3[%c0_2, %c0_3] : memref<128x384xbf16, #tpu.memory_space<vmem>>, vector<128x128xbf16>
    %cst = arith.constant dense<0.000000e+00> : vector<8x128xf32>
    %9 = tpu.matmul %7, %8, %cst {dimension_numbers = #tpu.dot_dimension_numbers<[1], [0], [0], [1], [0, 0, 1, 1], [], []>} : vector<8x128xbf16>, vector<128x128xbf16>, vector<8x128xf32> -> vector<8x128xf32>
    %c0_4 = arith.constant 0 : index
    %c0_5 = arith.constant 0 : index
    %10 = vector.load %arg4[%c0_4, %c0_5] : memref<1x384xf32, #tpu.memory_space<vmem>>, vector<1x128xf32>
    %11 = vector.shape_cast %10 : vector<1x128xf32> to vector<128xf32>
    %12 = vector.shape_cast %11 : vector<128xf32> to vector<1x128xf32>
    %13 = vector.broadcast %12 : vector<1x128xf32> to vector<8x128xf32>
    %14 = arith.addf %9, %13 : vector<8x128xf32>
    %15 = arith.truncf %14 : vector<8x128xf32> to vector<8x128xbf16>
    %16 = vector.extract_strided_slice %15 {offsets = [0, 0], sizes = [8, 32], strides = [1, 1]} : vector<8x128xbf16> to vector<8x32xbf16>
    %c0_6 = arith.constant 0 : index
    %c0_7 = arith.constant 0 : index
    %17 = vector.load %arg8[%c0_6, %c0_7] : memref<8x128xbf16, #tpu.memory_space<vmem>>, vector<8x32xbf16>
    %c0_8 = arith.constant 0 : index
    %c0_9 = arith.constant 0 : index
    %18 = vector.load %arg9[%c0_8, %c0_9] : memref<8x128xbf16, #tpu.memory_space<vmem>>, vector<8x32xbf16>
    %cst_10 = arith.constant dense<0.000000e+00> : vector<8x8xf32>
    %19 = tpu.matmul %16, %17, %cst_10 {dimension_numbers = #tpu.dot_dimension_numbers<[1], [1], [0], [0], [0, 0, 1, 0], [], []>} : vector<8x32xbf16>, vector<8x32xbf16>, vector<8x8xf32> -> vector<8x8xf32>
    %cst_11 = arith.constant dense<0xFF800000> : vector<8xf32>
    %20 = vector.multi_reduction <maximumf>, %19, %cst_11 [1] : vector<8x8xf32> to vector<8xf32>
    %21 = vector.shape_cast %20 : vector<8xf32> to vector<8x1xf32>
    %22 = vector.broadcast %21 : vector<8x1xf32> to vector<8x8xf32>
    %23 = arith.subf %19, %22 : vector<8x8xf32>
    %24 = math.exp %23 : vector<8x8xf32>
    %cst_12 = arith.constant dense<0.000000e+00> : vector<8xf32>
    %25 = vector.multi_reduction <add>, %24, %cst_12 [1] : vector<8x8xf32> to vector<8xf32>
    %26 = vector.shape_cast %25 : vector<8xf32> to vector<8x1xf32>
    %27 = arith.truncf %24 : vector<8x8xf32> to vector<8x8xbf16>
    %cst_13 = arith.constant dense<0.000000e+00> : vector<8x32xf32>
    %28 = tpu.matmul %27, %18, %cst_13 {dimension_numbers = #tpu.dot_dimension_numbers<[1], [0], [0], [1], [0, 0, 1, 1], [], []>} : vector<8x8xbf16>, vector<8x32xbf16>, vector<8x32xf32> -> vector<8x32xf32>
    %29 = tpu.reciprocal %26 {approx = true} : vector<8x1xf32> -> vector<8x1xf32>
    %30 = vector.broadcast %29 : vector<8x1xf32> to vector<8x32xf32>
    %31 = arith.mulf %28, %30 : vector<8x32xf32>
    %32 = arith.truncf %31 : vector<8x32xf32> to vector<8x32xbf16>
    %c0_14 = arith.constant 0 : index
    %c0_15 = arith.constant 0 : index
    %33 = vector.load %arg10[%c0_14, %c0_15] : memref<8x128xbf16, #tpu.memory_space<vmem>>, vector<8x32xbf16>
    tpu.vector_store %arg10[%c0_14, %c0_15], %32 {strides = array<i32>} : memref<8x128xbf16, #tpu.memory_space<vmem>>, vector<8x32xbf16>,
    %34 = vector.extract_strided_slice %15 {offsets = [0, 32], sizes = [8, 32], strides = [1, 1]} : vector<8x128xbf16> to vector<8x32xbf16>
    %c0_16 = arith.constant 0 : index
    %c32 = arith.constant 32 : index
    %35 = vector.load %arg8[%c0_16, %c32] : memref<8x128xbf16, #tpu.memory_space<vmem>>, vector<8x32xbf16>
    %c0_17 = arith.constant 0 : index
    %c32_18 = arith.constant 32 : index
    %36 = vector.load %arg9[%c0_17, %c32_18] : memref<8x128xbf16, #tpu.memory_space<vmem>>, vector<8x32xbf16>
    %cst_19 = arith.constant dense<0.000000e+00> : vector<8x8xf32>
    %37 = tpu.matmul %34, %35, %cst_19 {dimension_numbers = #tpu.dot_dimension_numbers<[1], [1], [0], [0], [0, 0, 1, 0], [], []>} : vector<8x32xbf16>, vector<8x32xbf16>, vector<8x8xf32> -> vector<8x8xf32>
    %cst_20 = arith.constant dense<0xFF800000> : vector<8xf32>
    %38 = vector.multi_reduction <maximumf>, %37, %cst_20 [1] : vector<8x8xf32> to vector<8xf32>
    %39 = vector.shape_cast %38 : vector<8xf32> to vector<8x1xf32>
    %40 = vector.broadcast %39 : vector<8x1xf32> to vector<8x8xf32>
    %41 = arith.subf %37, %40 : vector<8x8xf32>
    %42 = math.exp %41 : vector<8x8xf32>
    %cst_21 = arith.constant dense<0.000000e+00> : vector<8xf32>
    %43 = vector.multi_reduction <add>, %42, %cst_21 [1] : vector<8x8xf32> to vector<8xf32>
    %44 = vector.shape_cast %43 : vector<8xf32> to vector<8x1xf32>
    %45 = arith.truncf %42 : vector<8x8xf32> to vector<8x8xbf16>
    %cst_22 = arith.constant dense<0.000000e+00> : vector<8x32xf32>
    %46 = tpu.matmul %45, %36, %cst_22 {dimension_numbers = #tpu.dot_dimension_numbers<[1], [0], [0], [1], [0, 0, 1, 1], [], []>} : vector<8x8xbf16>, vector<8x32xbf16>, vector<8x32xf32> -> vector<8x32xf32>
    %47 = tpu.reciprocal %44 {approx = true} : vector<8x1xf32> -> vector<8x1xf32>
    %48 = vector.broadcast %47 : vector<8x1xf32> to vector<8x32xf32>
    %49 = arith.mulf %46, %48 : vector<8x32xf32>
    %50 = arith.truncf %49 : vector<8x32xf32> to vector<8x32xbf16>
    %c0_23 = arith.constant 0 : index
    %c32_24 = arith.constant 32 : index
    %51 = vector.load %arg10[%c0_23, %c32_24] : memref<8x128xbf16, #tpu.memory_space<vmem>>, vector<8x32xbf16>
    tpu.vector_store %arg10[%c0_23, %c32_24], %50 {strides = array<i32>} : memref<8x128xbf16, #tpu.memory_space<vmem>>, vector<8x32xbf16>,
    %52 = vector.extract_strided_slice %15 {offsets = [0, 64], sizes = [8, 32], strides = [1, 1]} : vector<8x128xbf16> to vector<8x32xbf16>
    %c0_25 = arith.constant 0 : index
    %c64 = arith.constant 64 : index
    %53 = vector.load %arg8[%c0_25, %c64] : memref<8x128xbf16, #tpu.memory_space<vmem>>, vector<8x32xbf16>
    %c0_26 = arith.constant 0 : index
    %c64_27 = arith.constant 64 : index
    %54 = vector.load %arg9[%c0_26, %c64_27] : memref<8x128xbf16, #tpu.memory_space<vmem>>, vector<8x32xbf16>
    %cst_28 = arith.constant dense<0.000000e+00> : vector<8x8xf32>
    %55 = tpu.matmul %52, %53, %cst_28 {dimension_numbers = #tpu.dot_dimension_numbers<[1], [1], [0], [0], [0, 0, 1, 0], [], []>} : vector<8x32xbf16>, vector<8x32xbf16>, vector<8x8xf32> -> vector<8x8xf32>
    %cst_29 = arith.constant dense<0xFF800000> : vector<8xf32>
    %56 = vector.multi_reduction <maximumf>, %55, %cst_29 [1] : vector<8x8xf32> to vector<8xf32>
    %57 = vector.shape_cast %56 : vector<8xf32> to vector<8x1xf32>
    %58 = vector.broadcast %57 : vector<8x1xf32> to vector<8x8xf32>
    %59 = arith.subf %55, %58 : vector<8x8xf32>
    %60 = math.exp %59 : vector<8x8xf32>
    %cst_30 = arith.constant dense<0.000000e+00> : vector<8xf32>
    %61 = vector.multi_reduction <add>, %60, %cst_30 [1] : vector<8x8xf32> to vector<8xf32>
    %62 = vector.shape_cast %61 : vector<8xf32> to vector<8x1xf32>
    %63 = arith.truncf %60 : vector<8x8xf32> to vector<8x8xbf16>
    %cst_31 = arith.constant dense<0.000000e+00> : vector<8x32xf32>
    %64 = tpu.matmul %63, %54, %cst_31 {dimension_numbers = #tpu.dot_dimension_numbers<[1], [0], [0], [1], [0, 0, 1, 1], [], []>} : vector<8x8xbf16>, vector<8x32xbf16>, vector<8x32xf32> -> vector<8x32xf32>
    %65 = tpu.reciprocal %62 {approx = true} : vector<8x1xf32> -> vector<8x1xf32>
    %66 = vector.broadcast %65 : vector<8x1xf32> to vector<8x32xf32>
    %67 = arith.mulf %64, %66 : vector<8x32xf32>
    %68 = arith.truncf %67 : vector<8x32xf32> to vector<8x32xbf16>
    %c0_32 = arith.constant 0 : index
    %c64_33 = arith.constant 64 : index
    %69 = vector.load %arg10[%c0_32, %c64_33] : memref<8x128xbf16, #tpu.memory_space<vmem>>, vector<8x32xbf16>
    tpu.vector_store %arg10[%c0_32, %c64_33], %68 {strides = array<i32>} : memref<8x128xbf16, #tpu.memory_space<vmem>>, vector<8x32xbf16>,
    %70 = vector.extract_strided_slice %15 {offsets = [0, 96], sizes = [8, 32], strides = [1, 1]} : vector<8x128xbf16> to vector<8x32xbf16>
    %c0_34 = arith.constant 0 : index
    %c96 = arith.constant 96 : index
    %71 = vector.load %arg8[%c0_34, %c96] : memref<8x128xbf16, #tpu.memory_space<vmem>>, vector<8x32xbf16>
    %c0_35 = arith.constant 0 : index
    %c96_36 = arith.constant 96 : index
    %72 = vector.load %arg9[%c0_35, %c96_36] : memref<8x128xbf16, #tpu.memory_space<vmem>>, vector<8x32xbf16>
    %cst_37 = arith.constant dense<0.000000e+00> : vector<8x8xf32>
    %73 = tpu.matmul %70, %71, %cst_37 {dimension_numbers = #tpu.dot_dimension_numbers<[1], [1], [0], [0], [0, 0, 1, 0], [], []>} : vector<8x32xbf16>, vector<8x32xbf16>, vector<8x8xf32> -> vector<8x8xf32>
    %cst_38 = arith.constant dense<0xFF800000> : vector<8xf32>
    %74 = vector.multi_reduction <maximumf>, %73, %cst_38 [1] : vector<8x8xf32> to vector<8xf32>
    %75 = vector.shape_cast %74 : vector<8xf32> to vector<8x1xf32>
    %76 = vector.broadcast %75 : vector<8x1xf32> to vector<8x8xf32>
    %77 = arith.subf %73, %76 : vector<8x8xf32>
    %78 = math.exp %77 : vector<8x8xf32>
    %cst_39 = arith.constant dense<0.000000e+00> : vector<8xf32>
    %79 = vector.multi_reduction <add>, %78, %cst_39 [1] : vector<8x8xf32> to vector<8xf32>
    %80 = vector.shape_cast %79 : vector<8xf32> to vector<8x1xf32>
    %81 = arith.truncf %78 : vector<8x8xf32> to vector<8x8xbf16>
    %cst_40 = arith.constant dense<0.000000e+00> : vector<8x32xf32>
    %82 = tpu.matmul %81, %72, %cst_40 {dimension_numbers = #tpu.dot_dimension_numbers<[1], [0], [0], [1], [0, 0, 1, 1], [], []>} : vector<8x8xbf16>, vector<8x32xbf16>, vector<8x32xf32> -> vector<8x32xf32>
    %83 = tpu.reciprocal %80 {approx = true} : vector<8x1xf32> -> vector<8x1xf32>
    %84 = vector.broadcast %83 : vector<8x1xf32> to vector<8x32xf32>
    %85 = arith.mulf %82, %84 : vector<8x32xf32>
    %86 = arith.truncf %85 : vector<8x32xf32> to vector<8x32xbf16>
    %c0_41 = arith.constant 0 : index
    %c96_42 = arith.constant 96 : index
    %87 = vector.load %arg10[%c0_41, %c96_42] : memref<8x128xbf16, #tpu.memory_space<vmem>>, vector<8x32xbf16>
    tpu.vector_store %arg10[%c0_41, %c96_42], %86 {strides = array<i32>} : memref<8x128xbf16, #tpu.memory_space<vmem>>, vector<8x32xbf16>,
    %c0_43 = arith.constant 0 : index
    %c0_44 = arith.constant 0 : index
    %88 = vector.load %arg10[%c0_43, %c0_44] : memref<8x128xbf16, #tpu.memory_space<vmem>>, vector<8x128xbf16>
    %c0_45 = arith.constant 0 : index
    %c0_46 = arith.constant 0 : index
    %89 = vector.load %arg5[%c0_45, %c0_46] : memref<128x128xbf16, #tpu.memory_space<vmem>>, vector<128x128xbf16>
    %cst_47 = arith.constant dense<0.000000e+00> : vector<8x128xf32>
    %90 = tpu.matmul %88, %89, %cst_47 {dimension_numbers = #tpu.dot_dimension_numbers<[1], [0], [0], [1], [0, 0, 1, 1], [], []>} : vector<8x128xbf16>, vector<128x128xbf16>, vector<8x128xf32> -> vector<8x128xf32>
    %c0_48 = arith.constant 0 : index
    %c0_49 = arith.constant 0 : index
    %91 = vector.load %arg6[%c0_48, %c0_49] : memref<1x128xf32, #tpu.memory_space<vmem>>, vector<1x128xf32>
    %92 = vector.shape_cast %91 : vector<1x128xf32> to vector<128xf32>
    %93 = vector.shape_cast %92 : vector<128xf32> to vector<1x128xf32>
    %94 = vector.broadcast %93 : vector<1x128xf32> to vector<8x128xf32>
    %95 = arith.addf %90, %94 : vector<8x128xf32>
    %c0_50 = arith.constant 0 : index
    %c0_51 = arith.constant 0 : index
    %c0_52 = arith.constant 0 : index
    %96 = vector.load %arg7[%c0_50, %c0_51, %c0_52] : memref<1x8x128xf32, #tpu.memory_space<vmem>>, vector<1x8x128xf32>
    %97 = vector.shape_cast %96 : vector<1x8x128xf32> to vector<8x128xf32>
    %98 = vector.shape_cast %95 : vector<8x128xf32> to vector<1x8x128xf32>
    tpu.vector_store %arg7[%c0_50, %c0_51, %c0_52], %98 {strides = array<i32>} : memref<1x8x128xf32, #tpu.memory_space<vmem>>, vector<1x8x128xf32>,
    return
  }
  func.func @transform_0(%arg0: i32, %arg1: i32) -> (i32, i32, i32) {
    %c0_i32 = arith.constant 0 : i32
    %c0_i32_0 = arith.constant 0 : i32
    %c0_i32_1 = arith.constant 0 : i32
    return %arg0, %c0_i32, %c0_i32_0 : i32, i32, i32
  }
  func.func @transform_1(%arg0: i32, %arg1: i32) -> (i32, i32) {
    %c0_i32 = arith.constant 0 : i32
    %c0_i32_0 = arith.constant 0 : i32
    %c0_i32_1 = arith.constant 0 : i32
    return %c0_i32, %c0_i32_0 : i32, i32
  }
  func.func @transform_2(%arg0: i32, %arg1: i32) -> (i32, i32) {
    %c0_i32 = arith.constant 0 : i32
    %c0_i32_0 = arith.constant 0 : i32
    %c0_i32_1 = arith.constant 0 : i32
    return %c0_i32, %c0_i32_0 : i32, i32
  }
  func.func @transform_3(%arg0: i32, %arg1: i32) -> (i32, i32) {
    %c0_i32 = arith.constant 0 : i32
    %c0_i32_0 = arith.constant 0 : i32
    %c0_i32_1 = arith.constant 0 : i32
    return %c0_i32, %c0_i32_0 : i32, i32
  }
  func.func @transform_4(%arg0: i32, %arg1: i32) -> (i32, i32) {
    %c0_i32 = arith.constant 0 : i32
    %c0_i32_0 = arith.constant 0 : i32
    %c0_i32_1 = arith.constant 0 : i32
    return %c0_i32, %c0_i32_0 : i32, i32
  }
  func.func @transform_5(%arg0: i32, %arg1: i32) -> (i32, i32, i32) {
    %c0_i32 = arith.constant 0 : i32
    %c0_i32_0 = arith.constant 0 : i32
    return %arg0, %arg1, %c0_i32 : i32, i32, i32
  }
}

module attributes {stable_mosaic.version = 11 : i64} {
  func.func @kernel(%arg0: i32, %arg1: i32, %arg2: memref<1x8x128xbf16, #tpu.memory_space<vmem>>, %arg3: memref<128x384xbf16, #tpu.memory_space<vmem>>, %arg4: memref<1x384xf32, #tpu.memory_space<vmem>>, %arg5: memref<128x128xbf16, #tpu.memory_space<vmem>>, %arg6: memref<1x128xf32, #tpu.memory_space<vmem>>, %arg7: memref<1x8x128xf32, #tpu.memory_space<vmem>>, %arg8: memref<8x128xbf16, #tpu.memory_space<vmem>>, %arg9: memref<8x128xbf16, #tpu.memory_space<vmem>>, %arg10: memref<8x128xbf16, #tpu.memory_space<vmem>>) attributes {dimension_semantics = [#tpu.dimension_semantics<parallel>, #tpu.dimension_semantics<arbitrary>], iteration_bounds = array<i64: 2, 1>, scalar_prefetch = 0 : i64, scratch_operands = 3 : i64, tpu.core_type = #tpu.core_type<tc>, window_params = [{transform_indices = @transform_0, window_bounds = array<i64: 1, 8, 128>}, {pipeline_mode = #tpu.pipeline_mode<synchronous>, transform_indices = @transform_1, window_bounds = array<i64: 128, 384>}, {pipeline_mode = #tpu.pipeline_mode<synchronous>, transform_indices = @transform_2, window_bounds = array<i64: 1, 384>}, {pipeline_mode = #tpu.pipeline_mode<synchronous>, transform_indices = @transform_3, window_bounds = array<i64: 128, 128>}, {pipeline_mode = #tpu.pipeline_mode<synchronous>, transform_indices = @transform_4, window_bounds = array<i64: 1, 128>}, {transform_indices = @transform_5, window_bounds = array<i64: 1, 8, 128>}]} {
    %c0_i32 = arith.constant 0 : i32
    %0 = arith.cmpi eq, %arg1, %c0_i32 : i32
    %1 = arith.extui %0 : i1 to i32
    %c0_i32_0 = arith.constant 0 : i32
    %2 = arith.cmpi ne, %1, %c0_i32_0 : i32
    scf.if %2 {
      %c0_53 = arith.constant 0 : index
      %c0_54 = arith.constant 0 : index
      %c0_55 = arith.constant 0 : index
      %99 = vector.load %arg2[%c0_53, %c0_54, %c0_55] : memref<1x8x128xbf16, #tpu.memory_space<vmem>>, vector<1x8x128xbf16>
      %100 = vector.shape_cast %99 : vector<1x8x128xbf16> to vector<8x128xbf16>
      %c0_56 = arith.constant 0 : index
      %c128 = arith.constant 128 : index
      %101 = vector.load %arg3[%c0_56, %c128] : memref<128x384xbf16, #tpu.memory_space<vmem>>, vector<128x128xbf16>
      %cst_57 = arith.constant dense<0.000000e+00> : vector<8x128xf32>
      %102 = tpu.matmul %100, %101, %cst_57 {dimension_numbers = #tpu.dot_dimension_numbers<[1], [0], [0], [1], [0, 0, 1, 1], [], []>} : vector<8x128xbf16>, vector<128x128xbf16>, vector<8x128xf32> -> vector<8x128xf32>
      %c0_58 = arith.constant 0 : index
      %c128_59 = arith.constant 128 : index
      %103 = vector.load %arg4[%c0_58, %c128_59] : memref<1x384xf32, #tpu.memory_space<vmem>>, vector<1x128xf32>
      %104 = vector.shape_cast %103 : vector<1x128xf32> to vector<128xf32>
      %105 = vector.shape_cast %104 : vector<128xf32> to vector<1x128xf32>
      %106 = vector.broadcast %105 : vector<1x128xf32> to vector<8x128xf32>
      %107 = arith.addf %102, %106 : vector<8x128xf32>
      %108 = arith.truncf %107 : vector<8x128xf32> to vector<8x128xbf16>
      %c0_60 = arith.constant 0 : index
      %c0_61 = arith.constant 0 : index
      %109 = vector.load %arg8[%c0_60, %c0_61] : memref<8x128xbf16, #tpu.memory_space<vmem>>, vector<8x128xbf16>
      tpu.vector_store %arg8[%c0_60, %c0_61], %108 {strides = array<i32>} : memref<8x128xbf16, #tpu.memory_space<vmem>>, vector<8x128xbf16>,
      %c0_62 = arith.constant 0 : index
      %c256 = arith.constant 256 : index
      %110 = vector.load %arg3[%c0_62, %c256] : memref<128x384xbf16, #tpu.memory_space<vmem>>, vector<128x128xbf16>
      %cst_63 = arith.constant dense<0.000000e+00> : vector<8x128xf32>
      %111 = tpu.matmul %100, %110, %cst_63 {dimension_numbers = #tpu.dot_dimension_numbers<[1], [0], [0], [1], [0, 0, 1, 1], [], []>} : vector<8x128xbf16>, vector<128x128xbf16>, vector<8x128xf32> -> vector<8x128xf32>
      %c0_64 = arith.constant 0 : index
      %c256_65 = arith.constant 256 : index
      %112 = vector.load %arg4[%c0_64, %c256_65] : memref<1x384xf32, #tpu.memory_space<vmem>>, vector<1x128xf32>
      %113 = vector.shape_cast %112 : vector<1x128xf32> to vector<128xf32>
      %114 = vector.shape_cast %113 : vector<128xf32> to vector<1x128xf32>
      %115 = vector.broadcast %114 : vector<1x128xf32> to vector<8x128xf32>
      %116 = arith.addf %111, %115 : vector<8x128xf32>
      %117 = arith.truncf %116 : vector<8x128xf32> to vector<8x128xbf16>
      %c0_66 = arith.constant 0 : index
      %c0_67 = arith.constant 0 : index
      %118 = vector.load %arg9[%c0_66, %c0_67] : memref<8x128xbf16, #tpu.memory_space<vmem>>, vector<8x128xbf16>
      tpu.vector_store %arg9[%c0_66, %c0_67], %117 {strides = array<i32>} : memref<8x128xbf16, #tpu.memory_space<vmem>>, vector<8x128xbf16>,
    } else {
    }
    %c8_i32 = arith.constant 8 : i32
    %3 = arith.muli %arg1, %c8_i32 : i32
    %4 = tpu.assume_multiple %3, 8 : i32
    %c0 = arith.constant 0 : index
    %5 = arith.index_cast %4 : i32 to index
    %c0_1 = arith.constant 0 : index
    %6 = vector.load %arg2[%c0, %5, %c0_1] : memref<1x8x128xbf16, #tpu.memory_space<vmem>>, vector<1x8x128xbf16>
    %7 = vector.shape_cast %6 : vector<1x8x128xbf16> to vector<8x128xbf16>
    %c0_2 = arith.constant 0 : index
    %c0_3 = arith.constant 0 : index
    %8 = vector.load %arg3[%c0_2, %c0_3] : memref<128x384xbf16, #tpu.memory_space<vmem>>, vector<128x128xbf16>
    %cst = arith.constant dense<0.000000e+00> : vector<8x128xf32>
    %9 = tpu.matmul %7, %8, %cst {dimension_numbers = #tpu.dot_dimension_numbers<[1], [0], [0], [1], [0, 0, 1, 1], [], []>} : vector<8x128xbf16>, vector<128x128xbf16>, vector<8x128xf32> -> vector<8x128xf32>
    %c0_4 = arith.constant 0 : index
    %c0_5 = arith.constant 0 : index
    %10 = vector.load %arg4[%c0_4, %c0_5] : memref<1x384xf32, #tpu.memory_space<vmem>>, vector<1x128xf32>
    %11 = vector.shape_cast %10 : vector<1x128xf32> to vector<128xf32>
    %12 = vector.shape_cast %11 : vector<128xf32> to vector<1x128xf32>
    %13 = vector.broadcast %12 : vector<1x128xf32> to vector<8x128xf32>
    %14 = arith.addf %9, %13 : vector<8x128xf32>
    %15 = arith.truncf %14 : vector<8x128xf32> to vector<8x128xbf16>
    %16 = vector.extract_strided_slice %15 {offsets = [0, 0], sizes = [8, 32], strides = [1, 1]} : vector<8x128xbf16> to vector<8x32xbf16>
    %c0_6 = arith.constant 0 : index
    %c0_7 = arith.constant 0 : index
    %17 = vector.load %arg8[%c0_6, %c0_7] : memref<8x128xbf16, #tpu.memory_space<vmem>>, vector<8x32xbf16>
    %c0_8 = arith.constant 0 : index
    %c0_9 = arith.constant 0 : index
    %18 = vector.load %arg9[%c0_8, %c0_9] : memref<8x128xbf16, #tpu.memory_space<vmem>>, vector<8x32xbf16>
    %cst_10 = arith.constant dense<0.000000e+00> : vector<8x8xf32>
    %19 = tpu.matmul %16, %17, %cst_10 {dimension_numbers = #tpu.dot_dimension_numbers<[1], [1], [0], [0], [0, 0, 1, 0], [], []>} : vector<8x32xbf16>, vector<8x32xbf16>, vector<8x8xf32> -> vector<8x8xf32>
    %cst_11 = arith.constant dense<0xFF800000> : vector<8xf32>
    %20 = vector.multi_reduction <maximumf>, %19, %cst_11 [1] : vector<8x8xf32> to vector<8xf32>
    %21 = vector.shape_cast %20 : vector<8xf32> to vector<8x1xf32>
    %22 = vector.broadcast %21 : vector<8x1xf32> to vector<8x8xf32>
    %23 = arith.subf %19, %22 : vector<8x8xf32>
    %24 = math.exp %23 : vector<8x8xf32>
    %cst_12 = arith.constant dense<0.000000e+00> : vector<8xf32>
    %25 = vector.multi_reduction <add>, %24, %cst_12 [1] : vector<8x8xf32> to vector<8xf32>
    %26 = vector.shape_cast %25 : vector<8xf32> to vector<8x1xf32>
    %27 = arith.truncf %24 : vector<8x8xf32> to vector<8x8xbf16>
    %cst_13 = arith.constant dense<0.000000e+00> : vector<8x32xf32>
    %28 = tpu.matmul %27, %18, %cst_13 {dimension_numbers = #tpu.dot_dimension_numbers<[1], [0], [0], [1], [0, 0, 1, 1], [], []>} : vector<8x8xbf16>, vector<8x32xbf16>, vector<8x32xf32> -> vector<8x32xf32>
    %29 = tpu.reciprocal %26 {approx = true} : vector<8x1xf32> -> vector<8x1xf32>
    %30 = vector.broadcast %29 : vector<8x1xf32> to vector<8x32xf32>
    %31 = arith.mulf %28, %30 : vector<8x32xf32>
    %32 = arith.truncf %31 : vector<8x32xf32> to vector<8x32xbf16>
    %c0_14 = arith.constant 0 : index
    %c0_15 = arith.constant 0 : index
    %33 = vector.load %arg10[%c0_14, %c0_15] : memref<8x128xbf16, #tpu.memory_space<vmem>>, vector<8x32xbf16>
    tpu.vector_store %arg10[%c0_14, %c0_15], %32 {strides = array<i32>} : memref<8x128xbf16, #tpu.memory_space<vmem>>, vector<8x32xbf16>,
    %34 = vector.extract_strided_slice %15 {offsets = [0, 32], sizes = [8, 32], strides = [1, 1]} : vector<8x128xbf16> to vector<8x32xbf16>
    %c0_16 = arith.constant 0 : index
    %c32 = arith.constant 32 : index
    %35 = vector.load %arg8[%c0_16, %c32] : memref<8x128xbf16, #tpu.memory_space<vmem>>, vector<8x32xbf16>
    %c0_17 = arith.constant 0 : index
    %c32_18 = arith.constant 32 : index
    %36 = vector.load %arg9[%c0_17, %c32_18] : memref<8x128xbf16, #tpu.memory_space<vmem>>, vector<8x32xbf16>
    %cst_19 = arith.constant dense<0.000000e+00> : vector<8x8xf32>
    %37 = tpu.matmul %34, %35, %cst_19 {dimension_numbers = #tpu.dot_dimension_numbers<[1], [1], [0], [0], [0, 0, 1, 0], [], []>} : vector<8x32xbf16>, vector<8x32xbf16>, vector<8x8xf32> -> vector<8x8xf32>
    %cst_20 = arith.constant dense<0xFF800000> : vector<8xf32>
    %38 = vector.multi_reduction <maximumf>, %37, %cst_20 [1] : vector<8x8xf32> to vector<8xf32>
    %39 = vector.shape_cast %38 : vector<8xf32> to vector<8x1xf32>
    %40 = vector.broadcast %39 : vector<8x1xf32> to vector<8x8xf32>
    %41 = arith.subf %37, %40 : vector<8x8xf32>
    %42 = math.exp %41 : vector<8x8xf32>
    %cst_21 = arith.constant dense<0.000000e+00> : vector<8xf32>
    %43 = vector.multi_reduction <add>, %42, %cst_21 [1] : vector<8x8xf32> to vector<8xf32>
    %44 = vector.shape_cast %43 : vector<8xf32> to vector<8x1xf32>
    %45 = arith.truncf %42 : vector<8x8xf32> to vector<8x8xbf16>
    %cst_22 = arith.constant dense<0.000000e+00> : vector<8x32xf32>
    %46 = tpu.matmul %45, %36, %cst_22 {dimension_numbers = #tpu.dot_dimension_numbers<[1], [0], [0], [1], [0, 0, 1, 1], [], []>} : vector<8x8xbf16>, vector<8x32xbf16>, vector<8x32xf32> -> vector<8x32xf32>
    %47 = tpu.reciprocal %44 {approx = true} : vector<8x1xf32> -> vector<8x1xf32>
    %48 = vector.broadcast %47 : vector<8x1xf32> to vector<8x32xf32>
    %49 = arith.mulf %46, %48 : vector<8x32xf32>
    %50 = arith.truncf %49 : vector<8x32xf32> to vector<8x32xbf16>
    %c0_23 = arith.constant 0 : index
    %c32_24 = arith.constant 32 : index
    %51 = vector.load %arg10[%c0_23, %c32_24] : memref<8x128xbf16, #tpu.memory_space<vmem>>, vector<8x32xbf16>
    tpu.vector_store %arg10[%c0_23, %c32_24], %50 {strides = array<i32>} : memref<8x128xbf16, #tpu.memory_space<vmem>>, vector<8x32xbf16>,
    %52 = vector.extract_strided_slice %15 {offsets = [0, 64], sizes = [8, 32], strides = [1, 1]} : vector<8x128xbf16> to vector<8x32xbf16>
    %c0_25 = arith.constant 0 : index
    %c64 = arith.constant 64 : index
    %53 = vector.load %arg8[%c0_25, %c64] : memref<8x128xbf16, #tpu.memory_space<vmem>>, vector<8x32xbf16>
    %c0_26 = arith.constant 0 : index
    %c64_27 = arith.constant 64 : index
    %54 = vector.load %arg9[%c0_26, %c64_27] : memref<8x128xbf16, #tpu.memory_space<vmem>>, vector<8x32xbf16>
    %cst_28 = arith.constant dense<0.000000e+00> : vector<8x8xf32>
    %55 = tpu.matmul %52, %53, %cst_28 {dimension_numbers = #tpu.dot_dimension_numbers<[1], [1], [0], [0], [0, 0, 1, 0], [], []>} : vector<8x32xbf16>, vector<8x32xbf16>, vector<8x8xf32> -> vector<8x8xf32>
    %cst_29 = arith.constant dense<0xFF800000> : vector<8xf32>
    %56 = vector.multi_reduction <maximumf>, %55, %cst_29 [1] : vector<8x8xf32> to vector<8xf32>
    %57 = vector.shape_cast %56 : vector<8xf32> to vector<8x1xf32>
    %58 = vector.broadcast %57 : vector<8x1xf32> to vector<8x8xf32>
    %59 = arith.subf %55, %58 : vector<8x8xf32>
    %60 = math.exp %59 : vector<8x8xf32>
    %cst_30 = arith.constant dense<0.000000e+00> : vector<8xf32>
    %61 = vector.multi_reduction <add>, %60, %cst_30 [1] : vector<8x8xf32> to vector<8xf32>
    %62 = vector.shape_cast %61 : vector<8xf32> to vector<8x1xf32>
    %63 = arith.truncf %60 : vector<8x8xf32> to vector<8x8xbf16>
    %cst_31 = arith.constant dense<0.000000e+00> : vector<8x32xf32>
    %64 = tpu.matmul %63, %54, %cst_31 {dimension_numbers = #tpu.dot_dimension_numbers<[1], [0], [0], [1], [0, 0, 1, 1], [], []>} : vector<8x8xbf16>, vector<8x32xbf16>, vector<8x32xf32> -> vector<8x32xf32>
    %65 = tpu.reciprocal %62 {approx = true} : vector<8x1xf32> -> vector<8x1xf32>
    %66 = vector.broadcast %65 : vector<8x1xf32> to vector<8x32xf32>
    %67 = arith.mulf %64, %66 : vector<8x32xf32>
    %68 = arith.truncf %67 : vector<8x32xf32> to vector<8x32xbf16>
    %c0_32 = arith.constant 0 : index
    %c64_33 = arith.constant 64 : index
    %69 = vector.load %arg10[%c0_32, %c64_33] : memref<8x128xbf16, #tpu.memory_space<vmem>>, vector<8x32xbf16>
    tpu.vector_store %arg10[%c0_32, %c64_33], %68 {strides = array<i32>} : memref<8x128xbf16, #tpu.memory_space<vmem>>, vector<8x32xbf16>,
    %70 = vector.extract_strided_slice %15 {offsets = [0, 96], sizes = [8, 32], strides = [1, 1]} : vector<8x128xbf16> to vector<8x32xbf16>
    %c0_34 = arith.constant 0 : index
    %c96 = arith.constant 96 : index
    %71 = vector.load %arg8[%c0_34, %c96] : memref<8x128xbf16, #tpu.memory_space<vmem>>, vector<8x32xbf16>
    %c0_35 = arith.constant 0 : index
    %c96_36 = arith.constant 96 : index
    %72 = vector.load %arg9[%c0_35, %c96_36] : memref<8x128xbf16, #tpu.memory_space<vmem>>, vector<8x32xbf16>
    %cst_37 = arith.constant dense<0.000000e+00> : vector<8x8xf32>
    %73 = tpu.matmul %70, %71, %cst_37 {dimension_numbers = #tpu.dot_dimension_numbers<[1], [1], [0], [0], [0, 0, 1, 0], [], []>} : vector<8x32xbf16>, vector<8x32xbf16>, vector<8x8xf32> -> vector<8x8xf32>
    %cst_38 = arith.constant dense<0xFF800000> : vector<8xf32>
    %74 = vector.multi_reduction <maximumf>, %73, %cst_38 [1] : vector<8x8xf32> to vector<8xf32>
    %75 = vector.shape_cast %74 : vector<8xf32> to vector<8x1xf32>
    %76 = vector.broadcast %75 : vector<8x1xf32> to vector<8x8xf32>
    %77 = arith.subf %73, %76 : vector<8x8xf32>
    %78 = math.exp %77 : vector<8x8xf32>
    %cst_39 = arith.constant dense<0.000000e+00> : vector<8xf32>
    %79 = vector.multi_reduction <add>, %78, %cst_39 [1] : vector<8x8xf32> to vector<8xf32>
    %80 = vector.shape_cast %79 : vector<8xf32> to vector<8x1xf32>
    %81 = arith.truncf %78 : vector<8x8xf32> to vector<8x8xbf16>
    %cst_40 = arith.constant dense<0.000000e+00> : vector<8x32xf32>
    %82 = tpu.matmul %81, %72, %cst_40 {dimension_numbers = #tpu.dot_dimension_numbers<[1], [0], [0], [1], [0, 0, 1, 1], [], []>} : vector<8x8xbf16>, vector<8x32xbf16>, vector<8x32xf32> -> vector<8x32xf32>
    %83 = tpu.reciprocal %80 {approx = true} : vector<8x1xf32> -> vector<8x1xf32>
    %84 = vector.broadcast %83 : vector<8x1xf32> to vector<8x32xf32>
    %85 = arith.mulf %82, %84 : vector<8x32xf32>
    %86 = arith.truncf %85 : vector<8x32xf32> to vector<8x32xbf16>
    %c0_41 = arith.constant 0 : index
    %c96_42 = arith.constant 96 : index
    %87 = vector.load %arg10[%c0_41, %c96_42] : memref<8x128xbf16, #tpu.memory_space<vmem>>, vector<8x32xbf16>
    tpu.vector_store %arg10[%c0_41, %c96_42], %86 {strides = array<i32>} : memref<8x128xbf16, #tpu.memory_space<vmem>>, vector<8x32xbf16>,
    %c0_43 = arith.constant 0 : index
    %c0_44 = arith.constant 0 : index
    %88 = vector.load %arg10[%c0_43, %c0_44] : memref<8x128xbf16, #tpu.memory_space<vmem>>, vector<8x128xbf16>
    %c0_45 = arith.constant 0 : index
    %c0_46 = arith.constant 0 : index
    %89 = vector.load %arg5[%c0_45, %c0_46] : memref<128x128xbf16, #tpu.memory_space<vmem>>, vector<128x128xbf16>
    %cst_47 = arith.constant dense<0.000000e+00> : vector<8x128xf32>
    %90 = tpu.matmul %88, %89, %cst_47 {dimension_numbers = #tpu.dot_dimension_numbers<[1], [0], [0], [1], [0, 0, 1, 1], [], []>} : vector<8x128xbf16>, vector<128x128xbf16>, vector<8x128xf32> -> vector<8x128xf32>
    %c0_48 = arith.constant 0 : index
    %c0_49 = arith.constant 0 : index
    %91 = vector.load %arg6[%c0_48, %c0_49] : memref<1x128xf32, #tpu.memory_space<vmem>>, vector<1x128xf32>
    %92 = vector.shape_cast %91 : vector<1x128xf32> to vector<128xf32>
    %93 = vector.shape_cast %92 : vector<128xf32> to vector<1x128xf32>
    %94 = vector.broadcast %93 : vector<1x128xf32> to vector<8x128xf32>
    %95 = arith.addf %90, %94 : vector<8x128xf32>
    %c0_50 = arith.constant 0 : index
    %c0_51 = arith.constant 0 : index
    %c0_52 = arith.constant 0 : index
    %96 = vector.load %arg7[%c0_50, %c0_51, %c0_52] : memref<1x8x128xf32, #tpu.memory_space<vmem>>, vector<1x8x128xf32>
    %97 = vector.shape_cast %96 : vector<1x8x128xf32> to vector<8x128xf32>
    %98 = vector.shape_cast %95 : vector<8x128xf32> to vector<1x8x128xf32>
    tpu.vector_store %arg7[%c0_50, %c0_51, %c0_52], %98 {strides = array<i32>} : memref<1x8x128xf32, #tpu.memory_space<vmem>>, vector<1x8x128xf32>,
    return
  }
  func.func @transform_0(%arg0: i32, %arg1: i32) -> (i32, i32, i32) {
    %c0_i32 = arith.constant 0 : i32
    %c0_i32_0 = arith.constant 0 : i32
    %c0_i32_1 = arith.constant 0 : i32
    return %arg0, %c0_i32, %c0_i32_0 : i32, i32, i32
  }
  func.func @transform_1(%arg0: i32, %arg1: i32) -> (i32, i32) {
    %c0_i32 = arith.constant 0 : i32
    %c0_i32_0 = arith.constant 0 : i32
    %c0_i32_1 = arith.constant 0 : i32
    return %c0_i32, %c0_i32_0 : i32, i32
  }
  func.func @transform_2(%arg0: i32, %arg1: i32) -> (i32, i32) {
    %c0_i32 = arith.constant 0 : i32
    %c0_i32_0 = arith.constant 0 : i32
    %c0_i32_1 = arith.constant 0 : i32
    return %c0_i32, %c0_i32_0 : i32, i32
  }
  func.func @transform_3(%arg0: i32, %arg1: i32) -> (i32, i32) {
    %c0_i32 = arith.constant 0 : i32
    %c0_i32_0 = arith.constant 0 : i32
    %c0_i32_1 = arith.constant 0 : i32
    return %c0_i32, %c0_i32_0 : i32, i32
  }
  func.func @transform_4(%arg0: i32, %arg1: i32) -> (i32, i32) {
    %c0_i32 = arith.constant 0 : i32
    %c0_i32_0 = arith.constant 0 : i32
    %c0_i32_1 = arith.constant 0 : i32
    return %c0_i32, %c0_i32_0 : i32, i32
  }
  func.func @transform_5(%arg0: i32, %arg1: i32) -> (i32, i32, i32) {
    %c0_i32 = arith.constant 0 : i32
    %c0_i32_0 = arith.constant 0 : i32
    return %arg0, %arg1, %c0_i32 : i32, i32, i32
  }
}

</mosaic_0001>

<llo_original>
// kernel: tpu_custom_call.1
$region0: #{tpu_custom_call.1}
  #allocation0 [shape = 'u32[]', space=smem, size = 0x4, offset = 0x4, fixed_abs, tag = 'smem constant byte address 0x4 - core index']
  #allocation1 [shape = 'u32[72,128]{1,0:T(1,128)}', space=vmem, size = 0x9000, scoped, tag = 'internal scratch']
  #allocation2 [shape = 'bf16[8,128]{1,0:T(8,128)(2,1)}', space=vmem, size = 0x800, scoped, tag = 'scratch operand']
  #allocation3 [shape = 'bf16[8,128]{1,0:T(8,128)(2,1)}', space=vmem, size = 0x800, scoped, tag = 'scratch operand']
  #allocation4 [shape = 'bf16[8,128]{1,0:T(8,128)(2,1)}', space=vmem, size = 0x800, scoped, tag = 'scratch operand']
  %s0 = inlined_call_operand.hbm [shape: bf16[2,8,128], index: 0, kind: input, shape index: {}]
  %s1 = inlined_call_operand.hbm [shape: bf16[128,384], index: 1, kind: input, shape index: {}]
  %s2 = inlined_call_operand.hbm [shape: f32[1,384], index: 2, kind: input, shape index: {}]
  %s3 = inlined_call_operand.hbm [shape: bf16[128,128], index: 3, kind: input, shape index: {}]
  %s4 = inlined_call_operand.vmem [shape: f32[1,128], index: 4, kind: input, shape index: {}]
  %s5 = inlined_call_operand.hbm [shape: f32[2,8,128], index: 5, kind: output, shape index: {}]
  %s6 = sld [smem:[#allocation0]]
  $region73: #{tpu_custom_call.1} parent=0
    _
  %s8 = ssub.s32 1, %s6
  %s9 = scalar_select 0, %s8, %s6
  $region1: #{tpu_custom_call.1} parent=0
    #allocation5 [shape = 'u8[4096]{0}', space=vmem, size = 0x1000, scoped, tag = 'input window, operand 0']
    #allocation6 [shape = 's32[2]{0}', space=sflag, size = 0x8, scoped, tag = 'scoped memory for tpu_custom_call.1']
    #allocation7 [shape = 's32[2]{0}', space=sflag, size = 0x8, scoped, tag = 'scoped memory for tpu_custom_call.1']
    #allocation8 [shape = 'u8[98304]{0}', space=vmem, size = 0x18000, scoped, tag = 'input window, operand 1, single buffered']
    #allocation9 [shape = 's32[1]{0}', space=sflag, size = 0x4, scoped, tag = 'scoped memory for tpu_custom_call.1']
    #allocation10 [shape = 'u8[1536]{0}', space=vmem, size = 0x800, scoped, tag = 'input window, operand 2, single buffered']
    #allocation11 [shape = 'u8[32768]{0}', space=vmem, size = 0x8000, scoped, tag = 'input window, operand 3, single buffered']
    #allocation12 [shape = 's32[1]{0}', space=sflag, size = 0x4, scoped, tag = 'scoped memory for tpu_custom_call.1']
    #allocation13 [shape = 'u8[8192]{0}', space=vmem, size = 0x2000, scoped, tag = 'output window, operand 0']
    %10 = vsyncpa [#allocation6], 0
    %s11 = scalar_lea.sflag [#allocation6], 1
    %12 = vsyncpa %s11, 0
    %13 = vsyncpa [#allocation9], 0
    %14 = vsyncpa [#allocation12], 0
    %15 = vsyncpa [#allocation7], 0
    %s16 = scalar_lea.sflag [#allocation7], 1
    %17 = vsyncpa %s16, 0
    loop: start=0, step=1, limit=4
    $region2: #{tpu_custom_call.1} parent=1 // loop_pre_header
      _
    $region3: #{tpu_custom_call.1} parent=1 // loop_header
      %s19 = sphi 0, %s23
      %p20 = scmp.ge.s32.totalorder %s19, 4
      %s26 = sphi 0, %s38
      %s27 = sphi 0, %s34
      %s28 = sphi 0, %s26
      %s29 = sphi 0, %s27
      %s30 = sphi 0, %s28
      %s31 = sphi 0, %s29
      %s41 = sphi 0, %s43
      %s44 = sphi 0, %s41
      %s45 = sphi 0, %s44
      %s61 = sphi 0, %s45
      %s65 = sphi 0, %s65
      %s67 = sphi 0, %s65
      %s68 = sphi 0, %s67
      %s82 = sphi 0, %s68
      %s86 = sphi 0, %s86
      %s88 = sphi 0, %s86
      %s89 = sphi 0, %s88
      %s103 = sphi 0, %s89
      %s107 = sphi 0, %s107
      %s109 = sphi 0, %s107
      %s110 = sphi 0, %s109
      %s124 = sphi 0, %s110
      %s128 = sphi 0, %s128
      %s130 = sphi 0, %s128
      %s131 = sphi 0, %s130
      %s145 = sphi 0, %s131
      %s153 = sphi 0, %s155
      %s156 = sphi 0, %s153
      %s157 = sphi 0, %s156
      %s173 = sphi 0, %s157
    $region4: #{tpu_custom_call.1} parent=1 // loop_header_branch
      %22 = sbr.rel (%p20) target = $region8
    $region5: #{tpu_custom_call.1} parent=1 // loop_body
      %s24 = ssub.s32 %s19, 1
      %s25 = ssub.s32 %s19, 2
      %s32 = sadd.s32 1, %s27
      %p33 = scmp.ge.s32.totalorder %s32, 1
      %s34 = scalar_select %p33, 0, %s32
      %s35 = sadd.s32 1, %s26
      %s36 = scalar_select %p33, %s35, %s26
      %p37 = scmp.ge.s32.totalorder %s36, 2
      %s38 = scalar_select %p37, 0, %s36
      %s39 = ssub.s32 %s26, %s38
      %p40 = scmp.eq.s32.totalorder %s39, 0
      %s42 = sadd.s32 %s41, 1
      %s43 = scalar_select %p40, %s41, %s42
      %p46 = pneg %p40
      %p47 = scmp.eq.s32.totalorder %s19, 1
      %p48 = por %p46, %p47
      %p49 = scmp.ne.s32.totalorder %s41, %s44
      %p50 = scmp.eq.s32.totalorder %s19, 0
      %p51 = por %p49, %p50
      %p52 = scmp.ne.s32.totalorder %s41, %s44
      %p53 = scmp.eq.s32.totalorder %s24, 1
      %p54 = por %p52, %p53
      %p55 = scmp.ne.s32.totalorder %s44, %s45
      %p56 = scmp.eq.s32.totalorder %s24, 0
      %p57 = por %p55, %p56
      %p58 = scmp.ne.s32.totalorder %s44, %s45
      %p59 = scmp.eq.s32.totalorder %s25, 1
      %p60 = por %p58, %p59
      %p62 = scmp.ne.s32.totalorder %s45, %s61
      %p63 = scmp.eq.s32.totalorder %s25, 0
      %p64 = por %p62, %p63
      %s66 = sadd.s32 %s65, 1
      %p69 = scmp.eq.s32.totalorder %s19, 1
      %p70 = scmp.ne.s32.totalorder %s65, %s67
      %p71 = scmp.eq.s32.totalorder %s19, 0
      %p72 = por %p70, %p71
      %p73 = scmp.ne.s32.totalorder %s65, %s67
      %p74 = scmp.eq.s32.totalorder %s24, 1
      %p75 = por %p73, %p74
      %p76 = scmp.ne.s32.totalorder %s67, %s68
      %p77 = scmp.eq.s32.totalorder %s24, 0
      %p78 = por %p76, %p77
      %p79 = scmp.ne.s32.totalorder %s67, %s68
      %p80 = scmp.eq.s32.totalorder %s25, 1
      %p81 = por %p79, %p80
      %p83 = scmp.ne.s32.totalorder %s68, %s82
      %p84 = scmp.eq.s32.totalorder %s25, 0
      %p85 = por %p83, %p84
      %s87 = sadd.s32 %s86, 1
      %p90 = scmp.eq.s32.totalorder %s19, 1
      %p91 = scmp.ne.s32.totalorder %s86, %s88
      %p92 = scmp.eq.s32.totalorder %s19, 0
      %p93 = por %p91, %p92
      %p94 = scmp.ne.s32.totalorder %s86, %s88
      %p95 = scmp.eq.s32.totalorder %s24, 1
      %p96 = por %p94, %p95
      %p97 = scmp.ne.s32.totalorder %s88, %s89
      %p98 = scmp.eq.s32.totalorder %s24, 0
      %p99 = por %p97, %p98
      %p100 = scmp.ne.s32.totalorder %s88, %s89
      %p101 = scmp.eq.s32.totalorder %s25, 1
      %p102 = por %p100, %p101
      %p104 = scmp.ne.s32.totalorder %s89, %s103
      %p105 = scmp.eq.s32.totalorder %s25, 0
      %p106 = por %p104, %p105
      %s108 = sadd.s32 %s107, 1
      %p111 = scmp.eq.s32.totalorder %s19, 1
      %p112 = scmp.ne.s32.totalorder %s107, %s109
      %p113 = scmp.eq.s32.totalorder %s19, 0
      %p114 = por %p112, %p113
      %p115 = scmp.ne.s32.totalorder %s107, %s109
      %p116 = scmp.eq.s32.totalorder %s24, 1
      %p117 = por %p115, %p116
      %p118 = scmp.ne.s32.totalorder %s109, %s110
      %p119 = scmp.eq.s32.totalorder %s24, 0
      %p120 = por %p118, %p119
      %p121 = scmp.ne.s32.totalorder %s109, %s110
      %p122 = scmp.eq.s32.totalorder %s25, 1
      %p123 = por %p121, %p122
      %p125 = scmp.ne.s32.totalorder %s110, %s124
      %p126 = scmp.eq.s32.totalorder %s25, 0
      %p127 = por %p125, %p126
      %s129 = sadd.s32 %s128, 1
      %p132 = scmp.eq.s32.totalorder %s19, 1
      %p133 = scmp.ne.s32.totalorder %s128, %s130
      %p134 = scmp.eq.s32.totalorder %s19, 0
      %p135 = por %p133, %p134
      %p136 = scmp.ne.s32.totalorder %s128, %s130
      %p137 = scmp.eq.s32.totalorder %s24, 1
      %p138 = por %p136, %p137
      %p139 = scmp.ne.s32.totalorder %s130, %s131
      %p140 = scmp.eq.s32.totalorder %s24, 0
      %p141 = por %p139, %p140
      %p142 = scmp.ne.s32.totalorder %s130, %s131
      %p143 = scmp.eq.s32.totalorder %s25, 1
      %p144 = por %p142, %p143
      %p146 = scmp.ne.s32.totalorder %s131, %s145
      %p147 = scmp.eq.s32.totalorder %s25, 0
      %p148 = por %p146, %p147
      %s149 = ssub.s32 %s26, %s38
      %s150 = ssub.s32 %s27, %s34
      %s151 = sor.u32 %s149, %s150
      %p152 = scmp.eq.s32.totalorder %s151, 0
      %s154 = sadd.s32 %s153, 1
      %s155 = scalar_select %p152, %s153, %s154
      %p158 = pneg %p152
      %p159 = scmp.eq.s32.totalorder %s19, 1
      %p160 = por %p158, %p159
      %p161 = scmp.ne.s32.totalorder %s153, %s156
      %p162 = scmp.eq.s32.totalorder %s19, 0
      %p163 = por %p161, %p162
      %p164 = scmp.ne.s32.totalorder %s153, %s156
      %p165 = scmp.eq.s32.totalorder %s24, 1
      %p166 = por %p164, %p165
      %p167 = scmp.ne.s32.totalorder %s156, %s157
      %p168 = scmp.eq.s32.totalorder %s24, 0
      %p169 = por %p167, %p168
      %p170 = scmp.ne.s32.totalorder %s156, %s157
      %p171 = scmp.eq.s32.totalorder %s25, 1
      %p172 = por %p170, %p171
      %p174 = scmp.ne.s32.totalorder %s157, %s173
      %p175 = scmp.eq.s32.totalorder %s25, 0
      %p176 = por %p174, %p175
      %p177 = scmp.le.s32.totalorder 1, %s19
      %p178 = scmp.lt.s32.totalorder %s19, 3
      %p179 = pnand %p177, %p178
      %p180 = pneg %p179
      // Predicated region
      $region9: #{tpu_custom_call.1} parent=5 // pred_check
        _
      $region10: #{tpu_custom_call.1} parent=5 // pred_check_branch
        %182 = sbr.rel (%p179) target = $region12
      $region11: #{tpu_custom_call.1} parent=5 // pred_region
        %s183 = ssub.s32 %s19, 1
        // Predicated region
        $region13: #{tpu_custom_call.1} parent=11 // pred_check
          %p184 = pneg %p78
        $region14: #{tpu_custom_call.1} parent=11 // pred_check_branch
          %186 = sbr.rel (%p184) target = $region16
        $region15: #{tpu_custom_call.1} parent=11 // pred_region
          %188 = vsyncadd [#allocation9], 0
          %s189 = sshll.u32 %s1, 4
          %s190 = int_to_ptr.hbm [resolvable:$true] %s189
          %s191 = sshll.u32 [#allocation8], 4
          %s192 = int_to_ptr.vmem [resolvable:$true] %s191
          %197 = dma.hbm_to_vmem [thread:$0]  %s190, 3072, %s192, [#allocation9], 192, 192, 12
        $region16: #{tpu_custom_call.1} parent=11 // pred_fallthru
          _
        // Predicated region
        $region17: #{tpu_custom_call.1} parent=11 // pred_check
          %p198 = pneg %p99
        $region18: #{tpu_custom_call.1} parent=11 // pred_check_branch
          %200 = sbr.rel (%p198) target = $region20
        $region19: #{tpu_custom_call.1} parent=11 // pred_region
          %202 = vsyncadd [#allocation9], 0
          %s204 = sshll.u32 %s2, 4
          %s205 = int_to_ptr.hbm [resolvable:$true] %s204
          %s206 = sshll.u32 [#allocation10], 4
          %s207 = int_to_ptr.vmem [resolvable:$true] %s206
          %209 = dma.hbm_to_vmem [thread:$0]  %s205, 48, %s207, [#allocation9]
        $region20: #{tpu_custom_call.1} parent=11 // pred_fallthru
          _
        // Predicated region
        $region21: #{tpu_custom_call.1} parent=11 // pred_check
          %p210 = pneg %p120
        $region22: #{tpu_custom_call.1} parent=11 // pred_check_branch
          %212 = sbr.rel (%p210) target = $region24
        $region23: #{tpu_custom_call.1} parent=11 // pred_region
          %214 = vsyncadd [#allocation12], 0
          %s215 = sshll.u32 %s3, 4
          %s216 = int_to_ptr.hbm [resolvable:$true] %s215
          %s217 = sshll.u32 [#allocation11], 4
          %s218 = int_to_ptr.vmem [resolvable:$true] %s217
          %223 = dma.hbm_to_vmem [thread:$0]  %s216, 1024, %s218, [#allocation12], 64, 64, 4
        $region24: #{tpu_custom_call.1} parent=11 // pred_fallthru
          _
        // Predicated region
        $region25: #{tpu_custom_call.1} parent=11 // pred_check
          %p224 = pneg %p141
        $region26: #{tpu_custom_call.1} parent=11 // pred_check_branch
          %226 = sbr.rel (%p224) target = $region28
        $region27: #{tpu_custom_call.1} parent=11 // pred_region
          _
        $region28: #{tpu_custom_call.1} parent=11 // pred_fallthru
          _
      $region12: #{tpu_custom_call.1} parent=5 // pred_fallthru
        _
      %p227 = scmp.lt.s32.totalorder %s19, 2
      // Predicated region
      $region29: #{tpu_custom_call.1} parent=5 // pred_check
        %p228 = pneg %p227
      $region30: #{tpu_custom_call.1} parent=5 // pred_check_branch
        %230 = sbr.rel (%p228) target = $region32
      $region31: #{tpu_custom_call.1} parent=5 // pred_region
        // Predicated region
        $region33: #{tpu_custom_call.1} parent=31 // pred_check
          %p231 = pneg %p51
        $region34: #{tpu_custom_call.1} parent=31 // pred_check_branch
          %233 = sbr.rel (%p231) target = $region36
        $region35: #{tpu_custom_call.1} parent=31 // pred_region
          %s234 = sand.u32 %s41, 1
          %s235 = scalar_lea.sflag [#allocation6], %s234
          %s236 = sand.u32 %s41, 1
          %s237 = smul.addr %s236, 4
          %s238 = scalar_lea.vmem [#allocation5], %s237
          %240 = vsyncadd %s235, 0
          %s241 = smul.addr %s26, 4
          %s242 = scalar_lea.hbm %s0, %s241
          %s244 = sshll.u32 %s242, 4
          %s245 = int_to_ptr.hbm [resolvable:$true] %s244
          %s246 = sshll.u32 %s238, 4
          %s247 = int_to_ptr.vmem [resolvable:$true] %s246
          %249 = dma.hbm_to_vmem [thread:$0]  %s245, 64, %s247, %s235
        $region36: #{tpu_custom_call.1} parent=31 // pred_fallthru
          _
      $region32: #{tpu_custom_call.1} parent=5 // pred_fallthru
        _
      %p250 = scmp.le.s32.totalorder 1, %s19
      %p251 = scmp.lt.s32.totalorder %s19, 3
      %p252 = pnand %p250, %p251
      %p253 = pneg %p252
      // Predicated region
      $region37: #{tpu_custom_call.1} parent=5 // pred_check
        _
      $region38: #{tpu_custom_call.1} parent=5 // pred_check_branch
        %255 = sbr.rel (%p252) target = $region40
      $region39: #{tpu_custom_call.1} parent=5 // pred_region
        %s256 = ssub.s32 %s19, 1
        %s257 = sand.u32 %s44, 1
        %s258 = scalar_lea.sflag [#allocation6], %s257
        %s259 = sand.u32 %s44, 1
        %s260 = smul.addr %s259, 4
        %s261 = scalar_lea.vmem [#allocation5], %s260
        // Predicated region
        $region41: #{tpu_custom_call.1} parent=39 // pred_check
          %p262 = pneg %p57
        $region42: #{tpu_custom_call.1} parent=39 // pred_check_branch
          %264 = sbr.rel (%p262) target = $region44
        $region43: #{tpu_custom_call.1} parent=39 // pred_region
          %266 = dma.done %s258, 64
        $region44: #{tpu_custom_call.1} parent=39 // pred_fallthru
          _
        // Predicated region
        $region45: #{tpu_custom_call.1} parent=39 // pred_check
          %p267 = pneg %p78
        $region46: #{tpu_custom_call.1} parent=39 // pred_check_branch
          %269 = sbr.rel (%p267) target = $region48
        $region47: #{tpu_custom_call.1} parent=39 // pred_region
          %271 = dma.done [#allocation9], 3072
        $region48: #{tpu_custom_call.1} parent=39 // pred_fallthru
          _
        // Predicated region
        $region49: #{tpu_custom_call.1} parent=39 // pred_check
          %p272 = pneg %p99
        $region50: #{tpu_custom_call.1} parent=39 // pred_check_branch
          %274 = sbr.rel (%p272) target = $region52
        $region51: #{tpu_custom_call.1} parent=39 // pred_region
          %276 = dma.done [#allocation9], 48
        $region52: #{tpu_custom_call.1} parent=39 // pred_fallthru
          _
        // Predicated region
        $region53: #{tpu_custom_call.1} parent=39 // pred_check
          %p277 = pneg %p120
        $region54: #{tpu_custom_call.1} parent=39 // pred_check_branch
          %279 = sbr.rel (%p277) target = $region56
        $region55: #{tpu_custom_call.1} parent=39 // pred_region
          %281 = dma.done [#allocation12], 1024
        $region56: #{tpu_custom_call.1} parent=39 // pred_fallthru
          _
        %s282 = sand.u32 %s44, 1
        %s283 = scalar_lea.sflag [#allocation6], %s282
        %s284 = sand.u32 %s44, 1
        %s285 = smul.addr %s284, 4
        %s286 = scalar_lea.vmem [#allocation5], %s285
        %p287 = pneg %p57
        %p288 = pneg %p54
        %p289 = pneg %p78
        %p290 = pneg %p75
        %p291 = pneg %p99
        %p292 = pneg %p96
        %p293 = pneg %p120
        %p294 = pneg %p117
        %p295 = pneg %p141
        %p296 = pneg %p138
        %p297 = pneg %p169
        %p298 = pneg %p166
        %s299 = sand.u32 %s156, 1
        %s300 = scalar_lea.sflag [#allocation7], %s299
        %s301 = sand.u32 %s156, 1
        %s302 = smul.addr %s301, 8
        %s303 = scalar_lea.vmem [#allocation13], %s302
        %p305 = scmp.eq.s32.totalorder %s29, 0
        // Predicated region
        $region57: #{tpu_custom_call.1} parent=39 // pred_check
          %p306 = pneg %p305
        $region58: #{tpu_custom_call.1} parent=39 // pred_check_branch
          %308 = sbr.rel (%p306) target = $region60
        $region59: #{tpu_custom_call.1} parent=39 // pred_region
          %v309 = vld [vmem:[%s261] sm:$0xf]
          %v310 = vld [vmem:[#allocation8 + $0x4] sm:$0xf]
          %v311 = vld [vmem:[#allocation8 + $0x10] sm:$0xf]
          %v312 = vld [vmem:[#allocation8 + $0x1c] sm:$0xf]
          %v313 = vld [vmem:[#allocation8 + $0x28] sm:$0xf]
          %v314 = vld [vmem:[#allocation8 + $0x34] sm:$0xf]
          %v315 = vld [vmem:[#allocation8 + $0x40] sm:$0xf]
          %v316 = vld [vmem:[#allocation8 + $0x4c] sm:$0xf]
          %v317 = vld [vmem:[#allocation8 + $0x58] sm:$0xf]
          %v318 = vld [vmem:[#allocation8 + $0x64] sm:$0xf]
          %v319 = vld [vmem:[#allocation8 + $0x70] sm:$0xf]
          %v320 = vld [vmem:[#allocation8 + $0x7c] sm:$0xf]
          %v321 = vld [vmem:[#allocation8 + $0x88] sm:$0xf]
          %v322 = vld [vmem:[#allocation8 + $0x94] sm:$0xf]
          %v323 = vld [vmem:[#allocation8 + $0xa0] sm:$0xf]
          %v324 = vld [vmem:[#allocation8 + $0xac] sm:$0xf]
          %v325 = vld [vmem:[#allocation8 + $0xb8] sm:$0xf]
          %v326 = vld [vmem:[#allocation10 + $0x1] sm:$0x1]
          %v328 = vperm.slane %v326, 0
          %v346 = vunpack.c.l.b16 %v310
          %v347 = vunpack.c.l.b16 %v311
          %v348 = vunpack.c.l.b16 %v312
          %v349 = vunpack.c.l.b16 %v313
          %v350 = vunpack.c.l.b16 %v314
          %v351 = vunpack.c.l.b16 %v315
          %v352 = vunpack.c.l.b16 %v316
          %v353 = vunpack.c.l.b16 %v317
          %v354 = vunpack.c.l.b16 %v318
          %v355 = vunpack.c.l.b16 %v319
          %v356 = vunpack.c.l.b16 %v320
          %v357 = vunpack.c.l.b16 %v321
          %v358 = vunpack.c.l.b16 %v322
          %v359 = vunpack.c.l.b16 %v323
          %v360 = vunpack.c.l.b16 %v324
          %v361 = vunpack.c.l.b16 %v325
          %v362 = vpack.c.b16 %v347, %v346
          %v363 = vpack.c.b16 %v349, %v348
          %v364 = vpack.c.b16 %v351, %v350
          %v365 = vpack.c.b16 %v353, %v352
          %v366 = vpack.c.b16 %v355, %v354
          %v367 = vpack.c.b16 %v357, %v356
          %v368 = vpack.c.b16 %v359, %v358
          %v369 = vpack.c.b16 %v361, %v360
          %378 = vmatpush.bf16.msra.mxu0 %v369
          %379 = vmatpush.bf16.msra.mxu0 %v368
          %380 = vmatpush.bf16.msra.mxu0 %v367
          %381 = vmatpush.bf16.msra.mxu0 %v366
          %382 = vmatpush.bf16.msra.mxu0 %v365
          %383 = vmatpush.bf16.msra.mxu0 %v364
          %384 = vmatpush.bf16.msra.mxu0 %v363
          %385 = vmatpush.bf16.msra.mxu0 %v362
          %386 = vmatmul.bf16.gmra.mxu0 %v309
          %v387 = vpop.f32.mrf.mxu0
          %v388 = vadd.f32 %v328, %v387
          %v389 = vpop.f32.mrf.mxu0
          %390 = vdwg.mxu0
          %v391 = vpack.c.bf16 %v388, %v388
          %392 = vst [vmem:[#allocation2] sm:$0xf] %v391
          %v393 = vld [vmem:[#allocation8 + $0x8] sm:$0xf]
          %v394 = vld [vmem:[#allocation8 + $0x14] sm:$0xf]
          %v395 = vld [vmem:[#allocation8 + $0x20] sm:$0xf]
          %v396 = vld [vmem:[#allocation8 + $0x2c] sm:$0xf]
          %v397 = vld [vmem:[#allocation8 + $0x38] sm:$0xf]
          %v398 = vld [vmem:[#allocation8 + $0x44] sm:$0xf]
          %v399 = vld [vmem:[#allocation8 + $0x50] sm:$0xf]
          %v400 = vld [vmem:[#allocation8 + $0x5c] sm:$0xf]
          %v401 = vld [vmem:[#allocation8 + $0x68] sm:$0xf]
          %v402 = vld [vmem:[#allocation8 + $0x74] sm:$0xf]
          %v403 = vld [vmem:[#allocation8 + $0x80] sm:$0xf]
          %v404 = vld [vmem:[#allocation8 + $0x8c] sm:$0xf]
          %v405 = vld [vmem:[#allocation8 + $0x98] sm:$0xf]
          %v406 = vld [vmem:[#allocation8 + $0xa4] sm:$0xf]
          %v407 = vld [vmem:[#allocation8 + $0xb0] sm:$0xf]
          %v408 = vld [vmem:[#allocation8 + $0xbc] sm:$0xf]
          %v409 = vld [vmem:[#allocation10 + $0x2] sm:$0x1]
          %v411 = vperm.slane %v409, 0
          %v429 = vunpack.c.l.b16 %v393
          %v430 = vunpack.c.l.b16 %v394
          %v431 = vunpack.c.l.b16 %v395
          %v432 = vunpack.c.l.b16 %v396
          %v433 = vunpack.c.l.b16 %v397
          %v434 = vunpack.c.l.b16 %v398
          %v435 = vunpack.c.l.b16 %v399
          %v436 = vunpack.c.l.b16 %v400
          %v437 = vunpack.c.l.b16 %v401
          %v438 = vunpack.c.l.b16 %v402
          %v439 = vunpack.c.l.b16 %v403
          %v440 = vunpack.c.l.b16 %v404
          %v441 = vunpack.c.l.b16 %v405
          %v442 = vunpack.c.l.b16 %v406
          %v443 = vunpack.c.l.b16 %v407
          %v444 = vunpack.c.l.b16 %v408
          %v445 = vpack.c.b16 %v430, %v429
          %v446 = vpack.c.b16 %v432, %v431
          %v447 = vpack.c.b16 %v434, %v433
          %v448 = vpack.c.b16 %v436, %v435
          %v449 = vpack.c.b16 %v438, %v437
          %v450 = vpack.c.b16 %v440, %v439
          %v451 = vpack.c.b16 %v442, %v441
          %v452 = vpack.c.b16 %v444, %v443
          %461 = vmatpush.bf16.msra.mxu0 %v452
          %462 = vmatpush.bf16.msra.mxu0 %v451
          %463 = vmatpush.bf16.msra.mxu0 %v450
          %464 = vmatpush.bf16.msra.mxu0 %v449
          %465 = vmatpush.bf16.msra.mxu0 %v448
          %466 = vmatpush.bf16.msra.mxu0 %v447
          %467 = vmatpush.bf16.msra.mxu0 %v446
          %468 = vmatpush.bf16.msra.mxu0 %v445
          %469 = vmatmul.bf16.gmra.mxu0 %v309
          %v470 = vpop.f32.mrf.mxu0
          %v471 = vadd.f32 %v411, %v470
          %v472 = vpop.f32.mrf.mxu0
          %473 = vdwg.mxu0
          %v474 = vpack.c.bf16 %v471, %v471
          %475 = vst [vmem:[#allocation3] sm:$0xf] %v474
        $region60: #{tpu_custom_call.1} parent=39 // pred_fallthru
          _
        %s476 = smul.u32 %s29, 8
        %s477 = sshra.s32 %s476, 3
        %s478 = sand.u32 %s476, 7
        %s479 = smul.addr %s477, 4
        %s480 = scalar_lea.vmem %s261, %s479 [#allocation5]
        %v481 = vld [vmem:[%s480] sm:$0xf]
        %v482 = vld [vmem:[#allocation8] sm:$0xf]
        %v483 = vld [vmem:[#allocation8 + $0xc] sm:$0xf]
        %v484 = vld [vmem:[#allocation8 + $0x18] sm:$0xf]
        %v485 = vld [vmem:[#allocation8 + $0x24] sm:$0xf]
        %v486 = vld [vmem:[#allocation8 + $0x30] sm:$0xf]
        %v487 = vld [vmem:[#allocation8 + $0x3c] sm:$0xf]
        %v488 = vld [vmem:[#allocation8 + $0x48] sm:$0xf]
        %v489 = vld [vmem:[#allocation8 + $0x54] sm:$0xf]
        %v490 = vld [vmem:[#allocation8 + $0x60] sm:$0xf]
        %v491 = vld [vmem:[#allocation8 + $0x6c] sm:$0xf]
        %v492 = vld [vmem:[#allocation8 + $0x78] sm:$0xf]
        %v493 = vld [vmem:[#allocation8 + $0x84] sm:$0xf]
        %v494 = vld [vmem:[#allocation8 + $0x90] sm:$0xf]
        %v495 = vld [vmem:[#allocation8 + $0x9c] sm:$0xf]
        %v496 = vld [vmem:[#allocation8 + $0xa8] sm:$0xf]
        %v497 = vld [vmem:[#allocation8 + $0xb4] sm:$0xf]
        %v498 = vld [vmem:[#allocation10] sm:$0x1]
        %v500 = vperm.slane %v498, 0
        %v518 = vunpack.c.l.b16 %v482
        %v519 = vunpack.c.l.b16 %v483
        %v520 = vunpack.c.l.b16 %v484
        %v521 = vunpack.c.l.b16 %v485
        %v522 = vunpack.c.l.b16 %v486
        %v523 = vunpack.c.l.b16 %v487
        %v524 = vunpack.c.l.b16 %v488
        %v525 = vunpack.c.l.b16 %v489
        %v526 = vunpack.c.l.b16 %v490
        %v527 = vunpack.c.l.b16 %v491
        %v528 = vunpack.c.l.b16 %v492
        %v529 = vunpack.c.l.b16 %v493
        %v530 = vunpack.c.l.b16 %v494
        %v531 = vunpack.c.l.b16 %v495
        %v532 = vunpack.c.l.b16 %v496
        %v533 = vunpack.c.l.b16 %v497
        %v534 = vpack.c.b16 %v519, %v518
        %v535 = vpack.c.b16 %v521, %v520
        %v536 = vpack.c.b16 %v523, %v522
        %v537 = vpack.c.b16 %v525, %v524
        %v538 = vpack.c.b16 %v527, %v526
        %v539 = vpack.c.b16 %v529, %v528
        %v540 = vpack.c.b16 %v531, %v530
        %v541 = vpack.c.b16 %v533, %v532
        %550 = vmatpush.bf16.msra.mxu0 %v541
        %551 = vmatpush.bf16.msra.mxu0 %v540
        %552 = vmatpush.bf16.msra.mxu0 %v539
        %553 = vmatpush.bf16.msra.mxu0 %v538
        %554 = vmatpush.bf16.msra.mxu0 %v537
        %555 = vmatpush.bf16.msra.mxu0 %v536
        %556 = vmatpush.bf16.msra.mxu0 %v535
        %557 = vmatpush.bf16.msra.mxu0 %v534
        %558 = vmatmul.bf16.gmra.mxu0 %v481
        %v559 = vpop.f32.mrf.mxu0
        %v560 = vadd.f32 %v500, %v559
        %v561 = vpop.f32.mrf.mxu0
        %562 = vdwg.mxu0
        %v563 = vpack.c.bf16 %v560, %v560
        %v564 = vld [vmem:[#allocation2] sm:$0xf]
        %v565 = vld [vmem:[#allocation3] sm:$0xf]
        %vm566 = vcmask 261120
        %v568 = vsel %vm566, %v563, 0
        %v571 = vsel %vm566, %v564, 0
        %573 = vmatpush.bf16.xpose.msra.mxu0 0
        %574 = vmatpush.bf16.xpose.msra.mxu0 0
        %575 = vmatpush.bf16.xpose.msra.mxu0 0
        %576 = vmatpush.bf16.xpose.msra.mxu0 0
        %577 = vmatpush.bf16.xpose.msra.mxu0 0
        %578 = vmatpush.bf16.xpose.msra.mxu0 0
        %579 = vmatpush.bf16.xpose.msra.mxu0 0
        %580 = vmatpush.bf16.xpose.msra.mxu0 %v571
        %581 = vmatmul.bf16.gmra.mxu0 %v568
        %v582 = vpop.f32.mrf.mxu0
        %v583 = vadd.f32 0.0, %v582
        %v584 = vpop.f32.mrf.mxu0
        %585 = vdwg.mxu0
        %vm586 = vcmask 64512
        %v587 = vsel %vm586, %v583, -inf
        %588 = vmax.xlane.f32.xlu0 %v587
        %v589 = vpop.xlane.xlu0 %588
        %v590 = vsub.f32 %v583, %v589
        %v591 = vmul.f32 %v590, 1.442695
        %v592 = vpow.pop %v591
        %v593 = vsel %vm586, %v592, 0.0
        %594 = vadd.xlane.f32.xlu0 %v593
        %v595 = vpop.xlane.xlu0 %594
        %v596 = vpack.c.bf16 %v592, %v592
        %v598 = vsel %vm586, %v596, 0
        %vm600 = vcmask 1043456
        %v602 = vsel %vm600, %v565, 0
        %604 = vmatpush.bf16.msra.mxu0 0
        %605 = vmatpush.bf16.msra.mxu0 0
        %606 = vmatpush.bf16.msra.mxu0 0
        %607 = vmatpush.bf16.msra.mxu0 0
        %608 = vmatpush.bf16.msra.mxu0 0
        %609 = vmatpush.bf16.msra.mxu0 0
        %610 = vmatpush.bf16.msra.mxu0 0
        %611 = vmatpush.bf16.msra.mxu0 %v602
        %612 = vmatmul.bf16.gmra.mxu0 %v598
        %v613 = vpop.f32.mrf.mxu0
        %v614 = vadd.f32 0.0, %v613
        %v615 = vpop.f32.mrf.mxu0
        %616 = vdwg.mxu0
        %v617 = vrcp.pop %v595
        %v618 = vmul.f32 %v614, %v617
        %v619 = vpack.c.bf16 %v618, %v618
        %vm620 = vcmask 257024
        %621 = vst.msk [vmem:[#allocation4] sm:$0xf] %vm620, %v619
        %v622 = vld [vmem:[#allocation2] sm:$0xf]
        %v623 = vld [vmem:[#allocation3] sm:$0xf]
        %v625 = vunpack.c.l.b16 %v563
        %v626 = vpack.c.b16 %v625, %v625
        %627 = vrot.lane.b32.xlu0 %v626, 96
        %v628 = vpop.permute.xlu0 %627
        %v630 = vunpack.c.l.b16 %v622
        %v631 = vpack.c.b16 %v630, %v630
        %632 = vrot.lane.b32.xlu0 %v631, 96
        %v633 = vpop.permute.xlu0 %632
        %v635 = vsel %vm566, %v628, 0
        %v638 = vsel %vm566, %v633, 0
        %640 = vmatpush.bf16.xpose.msra.mxu0 0
        %641 = vmatpush.bf16.xpose.msra.mxu0 0
        %642 = vmatpush.bf16.xpose.msra.mxu0 0
        %643 = vmatpush.bf16.xpose.msra.mxu0 0
        %644 = vmatpush.bf16.xpose.msra.mxu0 0
        %645 = vmatpush.bf16.xpose.msra.mxu0 0
        %646 = vmatpush.bf16.xpose.msra.mxu0 0
        %647 = vmatpush.bf16.xpose.msra.mxu0 %v638
        %648 = vmatmul.bf16.gmra.mxu0 %v635
        %v649 = vpop.f32.mrf.mxu0
        %v650 = vadd.f32 0.0, %v649
        %v651 = vpop.f32.mrf.mxu0
        %652 = vdwg.mxu0
        %v653 = vsel %vm586, %v650, -inf
        %654 = vmax.xlane.f32.xlu0 %v653
        %v655 = vpop.xlane.xlu0 %654
        %v656 = vsub.f32 %v650, %v655
        %v657 = vmul.f32 %v656, 1.442695
        %v658 = vpow.pop %v657
        %v659 = vsel %vm586, %v658, 0.0
        %660 = vadd.xlane.f32.xlu0 %v659
        %v661 = vpop.xlane.xlu0 %660
        %v662 = vpack.c.bf16 %v658, %v658
        %v664 = vunpack.c.l.b16 %v623
        %v665 = vpack.c.b16 %v664, %v664
        %666 = vrot.lane.b32.xlu0 %v665, 96
        %v667 = vpop.permute.xlu0 %666
        %v669 = vsel %vm586, %v662, 0
        %v672 = vsel %vm600, %v667, 0
        %674 = vmatpush.bf16.msra.mxu0 0
        %675 = vmatpush.bf16.msra.mxu0 0
        %676 = vmatpush.bf16.msra.mxu0 0
        %677 = vmatpush.bf16.msra.mxu0 0
        %678 = vmatpush.bf16.msra.mxu0 0
        %679 = vmatpush.bf16.msra.mxu0 0
        %680 = vmatpush.bf16.msra.mxu0 0
        %681 = vmatpush.bf16.msra.mxu0 %v672
        %682 = vmatmul.bf16.gmra.mxu0 %v669
        %v683 = vpop.f32.mrf.mxu0
        %v684 = vadd.f32 0.0, %v683
        %v685 = vpop.f32.mrf.mxu0
        %686 = vdwg.mxu0
        %v687 = vrcp.pop %v661
        %v688 = vmul.f32 %v684, %v687
        %v689 = vpack.c.bf16 %v688, %v688
        %691 = vrot.lane.b32.xlu0 %v689, 32
        %v692 = vpop.permute.xlu0 %691
        %vm694 = vcmask 519424
        %695 = vst.msk [vmem:[#allocation4] sm:$0xf] %vm694, %v692
        %v696 = vld [vmem:[#allocation2] sm:$0xf]
        %v697 = vld [vmem:[#allocation3] sm:$0xf]
        %698 = vrot.lane.b32.xlu0 %v626, 64
        %v699 = vpop.permute.xlu0 %698
        %v701 = vunpack.c.l.b16 %v696
        %v702 = vpack.c.b16 %v701, %v701
        %703 = vrot.lane.b32.xlu0 %v702, 64
        %v704 = vpop.permute.xlu0 %703
        %v706 = vsel %vm566, %v699, 0
        %v709 = vsel %vm566, %v704, 0
        %711 = vmatpush.bf16.xpose.msra.mxu0 0
        %712 = vmatpush.bf16.xpose.msra.mxu0 0
        %713 = vmatpush.bf16.xpose.msra.mxu0 0
        %714 = vmatpush.bf16.xpose.msra.mxu0 0
        %715 = vmatpush.bf16.xpose.msra.mxu0 0
        %716 = vmatpush.bf16.xpose.msra.mxu0 0
        %717 = vmatpush.bf16.xpose.msra.mxu0 0
        %718 = vmatpush.bf16.xpose.msra.mxu0 %v709
        %719 = vmatmul.bf16.gmra.mxu0 %v706
        %v720 = vpop.f32.mrf.mxu0
        %v721 = vadd.f32 0.0, %v720
        %v722 = vpop.f32.mrf.mxu0
        %723 = vdwg.mxu0
        %v724 = vsel %vm586, %v721, -inf
        %725 = vmax.xlane.f32.xlu0 %v724
        %v726 = vpop.xlane.xlu0 %725
        %v727 = vsub.f32 %v721, %v726
        %v728 = vmul.f32 %v727, 1.442695
        %v729 = vpow.pop %v728
        %v730 = vsel %vm586, %v729, 0.0
        %731 = vadd.xlane.f32.xlu0 %v730
        %v732 = vpop.xlane.xlu0 %731
        %v733 = vpack.c.bf16 %v729, %v729
        %v735 = vunpack.c.l.b16 %v697
        %v736 = vpack.c.b16 %v735, %v735
        %737 = vrot.lane.b32.xlu0 %v736, 64
        %v738 = vpop.permute.xlu0 %737
        %v740 = vsel %vm586, %v733, 0
        %v743 = vsel %vm600, %v738, 0
        %745 = vmatpush.bf16.msra.mxu0 0
        %746 = vmatpush.bf16.msra.mxu0 0
        %747 = vmatpush.bf16.msra.mxu0 0
        %748 = vmatpush.bf16.msra.mxu0 0
        %749 = vmatpush.bf16.msra.mxu0 0
        %750 = vmatpush.bf16.msra.mxu0 0
        %751 = vmatpush.bf16.msra.mxu0 0
        %752 = vmatpush.bf16.msra.mxu0 %v743
        %753 = vmatmul.bf16.gmra.mxu0 %v740
        %v754 = vpop.f32.mrf.mxu0
        %v755 = vadd.f32 0.0, %v754
        %v756 = vpop.f32.mrf.mxu0
        %757 = vdwg.mxu0
        %v758 = vrcp.pop %v732
        %v759 = vmul.f32 %v755, %v758
        %v760 = vpack.c.bf16 %v759, %v759
        %762 = vrot.lane.b32.xlu0 %v760, 64
        %v763 = vpop.permute.xlu0 %762
        %vm765 = vcmask 781824
        %766 = vst.msk [vmem:[#allocation4] sm:$0xf] %vm765, %v763
        %v767 = vld [vmem:[#allocation2] sm:$0xf]
        %v768 = vld [vmem:[#allocation3] sm:$0xf]
        %769 = vrot.lane.b32.xlu0 %v626, 32
        %v770 = vpop.permute.xlu0 %769
        %v772 = vunpack.c.l.b16 %v767
        %v773 = vpack.c.b16 %v772, %v772
        %774 = vrot.lane.b32.xlu0 %v773, 32
        %v775 = vpop.permute.xlu0 %774
        %v777 = vsel %vm566, %v770, 0
        %v780 = vsel %vm566, %v775, 0
        %782 = vmatpush.bf16.xpose.msra.mxu0 0
        %783 = vmatpush.bf16.xpose.msra.mxu0 0
        %784 = vmatpush.bf16.xpose.msra.mxu0 0
        %785 = vmatpush.bf16.xpose.msra.mxu0 0
        %786 = vmatpush.bf16.xpose.msra.mxu0 0
        %787 = vmatpush.bf16.xpose.msra.mxu0 0
        %788 = vmatpush.bf16.xpose.msra.mxu0 0
        %789 = vmatpush.bf16.xpose.msra.mxu0 %v780
        %790 = vmatmul.bf16.gmra.mxu0 %v777
        %v791 = vpop.f32.mrf.mxu0
        %v792 = vadd.f32 0.0, %v791
        %v793 = vpop.f32.mrf.mxu0
        %794 = vdwg.mxu0
        %v795 = vsel %vm586, %v792, -inf
        %796 = vmax.xlane.f32.xlu0 %v795
        %v797 = vpop.xlane.xlu0 %796
        %v798 = vsub.f32 %v792, %v797
        %v799 = vmul.f32 %v798, 1.442695
        %v800 = vpow.pop %v799
        %v801 = vsel %vm586, %v800, 0.0
        %802 = vadd.xlane.f32.xlu0 %v801
        %v803 = vpop.xlane.xlu0 %802
        %v804 = vpack.c.bf16 %v800, %v800
        %v806 = vunpack.c.l.b16 %v768
        %v807 = vpack.c.b16 %v806, %v806
        %808 = vrot.lane.b32.xlu0 %v807, 32
        %v809 = vpop.permute.xlu0 %808
        %v811 = vsel %vm586, %v804, 0
        %v814 = vsel %vm600, %v809, 0
        %816 = vmatpush.bf16.msra.mxu0 0
        %817 = vmatpush.bf16.msra.mxu0 0
        %818 = vmatpush.bf16.msra.mxu0 0
        %819 = vmatpush.bf16.msra.mxu0 0
        %820 = vmatpush.bf16.msra.mxu0 0
        %821 = vmatpush.bf16.msra.mxu0 0
        %822 = vmatpush.bf16.msra.mxu0 0
        %823 = vmatpush.bf16.msra.mxu0 %v814
        %824 = vmatmul.bf16.gmra.mxu0 %v811
        %v825 = vpop.f32.mrf.mxu0
        %v826 = vadd.f32 0.0, %v825
        %v827 = vpop.f32.mrf.mxu0
        %828 = vdwg.mxu0
        %v829 = vrcp.pop %v803
        %v830 = vmul.f32 %v826, %v829
        %v831 = vpack.c.bf16 %v830, %v830
        %833 = vrot.lane.b32.xlu0 %v831, 96
        %v834 = vpop.permute.xlu0 %833
        %vm836 = vcmask 1044224
        %837 = vst.msk [vmem:[#allocation4] sm:$0xf] %vm836, %v834
        %v838 = vld [vmem:[#allocation4] sm:$0xf]
        %v839 = vld [vmem:[#allocation11] sm:$0xf]
        %v840 = vld [vmem:[#allocation11 + $0x4] sm:$0xf]
        %v841 = vld [vmem:[#allocation11 + $0x8] sm:$0xf]
        %v842 = vld [vmem:[#allocation11 + $0xc] sm:$0xf]
        %v843 = vld [vmem:[#allocation11 + $0x10] sm:$0xf]
        %v844 = vld [vmem:[#allocation11 + $0x14] sm:$0xf]
        %v845 = vld [vmem:[#allocation11 + $0x18] sm:$0xf]
        %v846 = vld [vmem:[#allocation11 + $0x1c] sm:$0xf]
        %v847 = vld [vmem:[#allocation11 + $0x20] sm:$0xf]
        %v848 = vld [vmem:[#allocation11 + $0x24] sm:$0xf]
        %v849 = vld [vmem:[#allocation11 + $0x28] sm:$0xf]
        %v850 = vld [vmem:[#allocation11 + $0x2c] sm:$0xf]
        %v851 = vld [vmem:[#allocation11 + $0x30] sm:$0xf]
        %v852 = vld [vmem:[#allocation11 + $0x34] sm:$0xf]
        %v853 = vld [vmem:[#allocation11 + $0x38] sm:$0xf]
        %v854 = vld [vmem:[#allocation11 + $0x3c] sm:$0xf]
        %v855 = vld [vmem:[%s4] sm:$0x1]
        %v857 = vperm.slane %v855, 0
        %v875 = vunpack.c.l.b16 %v839
        %v876 = vunpack.c.l.b16 %v840
        %v877 = vunpack.c.l.b16 %v841
        %v878 = vunpack.c.l.b16 %v842
        %v879 = vunpack.c.l.b16 %v843
        %v880 = vunpack.c.l.b16 %v844
        %v881 = vunpack.c.l.b16 %v845
        %v882 = vunpack.c.l.b16 %v846
        %v883 = vunpack.c.l.b16 %v847
        %v884 = vunpack.c.l.b16 %v848
        %v885 = vunpack.c.l.b16 %v849
        %v886 = vunpack.c.l.b16 %v850
        %v887 = vunpack.c.l.b16 %v851
        %v888 = vunpack.c.l.b16 %v852
        %v889 = vunpack.c.l.b16 %v853
        %v890 = vunpack.c.l.b16 %v854
        %v891 = vpack.c.b16 %v876, %v875
        %v892 = vpack.c.b16 %v878, %v877
        %v893 = vpack.c.b16 %v880, %v879
        %v894 = vpack.c.b16 %v882, %v881
        %v895 = vpack.c.b16 %v884, %v883
        %v896 = vpack.c.b16 %v886, %v885
        %v897 = vpack.c.b16 %v888, %v887
        %v898 = vpack.c.b16 %v890, %v889
        %907 = vmatpush.bf16.msra.mxu0 %v898
        %908 = vmatpush.bf16.msra.mxu0 %v897
        %909 = vmatpush.bf16.msra.mxu0 %v896
        %910 = vmatpush.bf16.msra.mxu0 %v895
        %911 = vmatpush.bf16.msra.mxu0 %v894
        %912 = vmatpush.bf16.msra.mxu0 %v893
        %913 = vmatpush.bf16.msra.mxu0 %v892
        %914 = vmatpush.bf16.msra.mxu0 %v891
        %915 = vmatmul.bf16.gmra.mxu0 %v838
        %v916 = vpop.f32.mrf.mxu0
        %v917 = vadd.f32 %v857, %v916
        %v918 = vpop.f32.mrf.mxu0
        %919 = vdwg.mxu0
        %920 = vst [vmem:[%s303] sm:$0xff] %v917
        %s921 = sand.u32 %s156, 1
        %s922 = scalar_lea.sflag [#allocation7], %s921
        %s923 = sand.u32 %s156, 1
        %s924 = smul.addr %s923, 8
        %s925 = scalar_lea.vmem [#allocation13], %s924
        // Predicated region
        $region61: #{tpu_custom_call.1} parent=39 // pred_check
          %p926 = pneg %p166
        $region62: #{tpu_custom_call.1} parent=39 // pred_check_branch
          %928 = sbr.rel (%p926) target = $region64
        $region63: #{tpu_custom_call.1} parent=39 // pred_region
          %930 = vsyncadd %s922, 0
          %s931 = sadd.s32 %s29, %s28
          %s932 = smul.addr %s931, 8
          %s933 = scalar_lea.hbm %s5, %s932
          %s935 = sshll.u32 %s925, 4
          %s936 = int_to_ptr.vmem [resolvable:$true] %s935
          %s937 = sshll.u32 %s933, 4
          %s938 = int_to_ptr.hbm [resolvable:$true] %s937
          %940 = dma.vmem_to_hbm [thread:$0]  %s936, 128, %s938, %s922
        $region64: #{tpu_custom_call.1} parent=39 // pred_fallthru
          _
      $region40: #{tpu_custom_call.1} parent=5 // pred_fallthru
        _
      %p941 = scmp.le.s32.totalorder 2, %s19
      // Predicated region
      $region65: #{tpu_custom_call.1} parent=5 // pred_check
        %p942 = pneg %p941
      $region66: #{tpu_custom_call.1} parent=5 // pred_check_branch
        %944 = sbr.rel (%p942) target = $region68
      $region67: #{tpu_custom_call.1} parent=5 // pred_region
        %s945 = ssub.s32 %s19, 2
        // Predicated region
        $region69: #{tpu_custom_call.1} parent=67 // pred_check
          %p946 = pneg %p172
        $region70: #{tpu_custom_call.1} parent=67 // pred_check_branch
          %948 = sbr.rel (%p946) target = $region72
        $region71: #{tpu_custom_call.1} parent=67 // pred_region
          %s949 = sand.u32 %s157, 1
          %s950 = scalar_lea.sflag [#allocation7], %s949
          %s951 = sand.u32 %s157, 1
          %s952 = smul.addr %s951, 8
          %s953 = scalar_lea.vmem [#allocation13], %s952
          %955 = dma.done %s950, 128
        $region72: #{tpu_custom_call.1} parent=67 // pred_fallthru
          _
      $region68: #{tpu_custom_call.1} parent=5 // pred_fallthru
        _
    $region6: #{tpu_custom_call.1} parent=1 // loop_footer
      %s23 = sadd.s32 1, %s19
    $region7: #{tpu_custom_call.1} parent=1 // loop_footer_branch
      %18 = sbr.rel target = $region3
    $region8: #{tpu_custom_call.1} parent=1 // loop_exit
      _
    %956 = vsyncpa [#allocation6], 1
    %s957 = scalar_lea.sflag [#allocation6], 1
    %958 = vsyncpa %s957, 1
    %959 = vsyncpa [#allocation9], 1
    %960 = vsyncpa [#allocation12], 1
    %961 = vsyncpa [#allocation7], 1
    %s962 = scalar_lea.sflag [#allocation7], 1
    %963 = vsyncpa %s962, 1

// kernel: tpu_custom_call.1
$region0: #{tpu_custom_call.1}
  #allocation0 [shape = 'u32[]', space=smem, size = 0x4, offset = 0x4, fixed_abs, tag = 'smem constant byte address 0x4 - core index']
  #allocation1 [shape = 'u32[72,128]{1,0:T(1,128)}', space=vmem, size = 0x9000, scoped, tag = 'internal scratch']
  #allocation2 [shape = 'bf16[8,128]{1,0:T(8,128)(2,1)}', space=vmem, size = 0x800, scoped, tag = 'scratch operand']
  #allocation3 [shape = 'bf16[8,128]{1,0:T(8,128)(2,1)}', space=vmem, size = 0x800, scoped, tag = 'scratch operand']
  #allocation4 [shape = 'bf16[8,128]{1,0:T(8,128)(2,1)}', space=vmem, size = 0x800, scoped, tag = 'scratch operand']
  %s0 = inlined_call_operand.hbm [shape: bf16[2,8,128], index: 0, kind: input, shape index: {}]
  %s1 = inlined_call_operand.hbm [shape: bf16[128,384], index: 1, kind: input, shape index: {}]
  %s2 = inlined_call_operand.hbm [shape: f32[1,384], index: 2, kind: input, shape index: {}]
  %s3 = inlined_call_operand.hbm [shape: bf16[128,128], index: 3, kind: input, shape index: {}]
  %s4 = inlined_call_operand.vmem [shape: f32[1,128], index: 4, kind: input, shape index: {}]
  %s5 = inlined_call_operand.hbm [shape: f32[2,8,128], index: 5, kind: output, shape index: {}]
  %s6 = sld [smem:[#allocation0]]
  $region73: #{tpu_custom_call.1} parent=0
    _
  %s8 = ssub.s32 1, %s6
  %s9 = scalar_select 0, %s8, %s6
  $region1: #{tpu_custom_call.1} parent=0
    #allocation5 [shape = 'u8[4096]{0}', space=vmem, size = 0x1000, scoped, tag = 'input window, operand 0']
    #allocation6 [shape = 's32[2]{0}', space=sflag, size = 0x8, scoped, tag = 'scoped memory for tpu_custom_call.1']
    #allocation7 [shape = 's32[2]{0}', space=sflag, size = 0x8, scoped, tag = 'scoped memory for tpu_custom_call.1']
    #allocation8 [shape = 'u8[98304]{0}', space=vmem, size = 0x18000, scoped, tag = 'input window, operand 1, single buffered']
    #allocation9 [shape = 's32[1]{0}', space=sflag, size = 0x4, scoped, tag = 'scoped memory for tpu_custom_call.1']
    #allocation10 [shape = 'u8[1536]{0}', space=vmem, size = 0x800, scoped, tag = 'input window, operand 2, single buffered']
    #allocation11 [shape = 'u8[32768]{0}', space=vmem, size = 0x8000, scoped, tag = 'input window, operand 3, single buffered']
    #allocation12 [shape = 's32[1]{0}', space=sflag, size = 0x4, scoped, tag = 'scoped memory for tpu_custom_call.1']
    #allocation13 [shape = 'u8[8192]{0}', space=vmem, size = 0x2000, scoped, tag = 'output window, operand 0']
    %10 = vsyncpa [#allocation6], 0
    %s11 = scalar_lea.sflag [#allocation6], 1
    %12 = vsyncpa %s11, 0
    %13 = vsyncpa [#allocation9], 0
    %14 = vsyncpa [#allocation12], 0
    %15 = vsyncpa [#allocation7], 0
    %s16 = scalar_lea.sflag [#allocation7], 1
    %17 = vsyncpa %s16, 0
    loop: start=0, step=1, limit=4
    $region2: #{tpu_custom_call.1} parent=1 // loop_pre_header
      _
    $region3: #{tpu_custom_call.1} parent=1 // loop_header
      %s19 = sphi 0, %s23
      %p20 = scmp.ge.s32.totalorder %s19, 4
      %s26 = sphi 0, %s38
      %s27 = sphi 0, %s34
      %s28 = sphi 0, %s26
      %s29 = sphi 0, %s27
      %s30 = sphi 0, %s28
      %s31 = sphi 0, %s29
      %s41 = sphi 0, %s43
      %s44 = sphi 0, %s41
      %s45 = sphi 0, %s44
      %s61 = sphi 0, %s45
      %s65 = sphi 0, %s65
      %s67 = sphi 0, %s65
      %s68 = sphi 0, %s67
      %s82 = sphi 0, %s68
      %s86 = sphi 0, %s86
      %s88 = sphi 0, %s86
      %s89 = sphi 0, %s88
      %s103 = sphi 0, %s89
      %s107 = sphi 0, %s107
      %s109 = sphi 0, %s107
      %s110 = sphi 0, %s109
      %s124 = sphi 0, %s110
      %s128 = sphi 0, %s128
      %s130 = sphi 0, %s128
      %s131 = sphi 0, %s130
      %s145 = sphi 0, %s131
      %s153 = sphi 0, %s155
      %s156 = sphi 0, %s153
      %s157 = sphi 0, %s156
      %s173 = sphi 0, %s157
    $region4: #{tpu_custom_call.1} parent=1 // loop_header_branch
      %22 = sbr.rel (%p20) target = $region8
    $region5: #{tpu_custom_call.1} parent=1 // loop_body
      %s24 = ssub.s32 %s19, 1
      %s25 = ssub.s32 %s19, 2
      %s32 = sadd.s32 1, %s27
      %p33 = scmp.ge.s32.totalorder %s32, 1
      %s34 = scalar_select %p33, 0, %s32
      %s35 = sadd.s32 1, %s26
      %s36 = scalar_select %p33, %s35, %s26
      %p37 = scmp.ge.s32.totalorder %s36, 2
      %s38 = scalar_select %p37, 0, %s36
      %s39 = ssub.s32 %s26, %s38
      %p40 = scmp.eq.s32.totalorder %s39, 0
      %s42 = sadd.s32 %s41, 1
      %s43 = scalar_select %p40, %s41, %s42
      %p46 = pneg %p40
      %p47 = scmp.eq.s32.totalorder %s19, 1
      %p48 = por %p46, %p47
      %p49 = scmp.ne.s32.totalorder %s41, %s44
      %p50 = scmp.eq.s32.totalorder %s19, 0
      %p51 = por %p49, %p50
      %p52 = scmp.ne.s32.totalorder %s41, %s44
      %p53 = scmp.eq.s32.totalorder %s24, 1
      %p54 = por %p52, %p53
      %p55 = scmp.ne.s32.totalorder %s44, %s45
      %p56 = scmp.eq.s32.totalorder %s24, 0
      %p57 = por %p55, %p56
      %p58 = scmp.ne.s32.totalorder %s44, %s45
      %p59 = scmp.eq.s32.totalorder %s25, 1
      %p60 = por %p58, %p59
      %p62 = scmp.ne.s32.totalorder %s45, %s61
      %p63 = scmp.eq.s32.totalorder %s25, 0
      %p64 = por %p62, %p63
      %s66 = sadd.s32 %s65, 1
      %p69 = scmp.eq.s32.totalorder %s19, 1
      %p70 = scmp.ne.s32.totalorder %s65, %s67
      %p71 = scmp.eq.s32.totalorder %s19, 0
      %p72 = por %p70, %p71
      %p73 = scmp.ne.s32.totalorder %s65, %s67
      %p74 = scmp.eq.s32.totalorder %s24, 1
      %p75 = por %p73, %p74
      %p76 = scmp.ne.s32.totalorder %s67, %s68
      %p77 = scmp.eq.s32.totalorder %s24, 0
      %p78 = por %p76, %p77
      %p79 = scmp.ne.s32.totalorder %s67, %s68
      %p80 = scmp.eq.s32.totalorder %s25, 1
      %p81 = por %p79, %p80
      %p83 = scmp.ne.s32.totalorder %s68, %s82
      %p84 = scmp.eq.s32.totalorder %s25, 0
      %p85 = por %p83, %p84
      %s87 = sadd.s32 %s86, 1
      %p90 = scmp.eq.s32.totalorder %s19, 1
      %p91 = scmp.ne.s32.totalorder %s86, %s88
      %p92 = scmp.eq.s32.totalorder %s19, 0
      %p93 = por %p91, %p92
      %p94 = scmp.ne.s32.totalorder %s86, %s88
      %p95 = scmp.eq.s32.totalorder %s24, 1
      %p96 = por %p94, %p95
      %p97 = scmp.ne.s32.totalorder %s88, %s89
      %p98 = scmp.eq.s32.totalorder %s24, 0
      %p99 = por %p97, %p98
      %p100 = scmp.ne.s32.totalorder %s88, %s89
      %p101 = scmp.eq.s32.totalorder %s25, 1
      %p102 = por %p100, %p101
      %p104 = scmp.ne.s32.totalorder %s89, %s103
      %p105 = scmp.eq.s32.totalorder %s25, 0
      %p106 = por %p104, %p105
      %s108 = sadd.s32 %s107, 1
      %p111 = scmp.eq.s32.totalorder %s19, 1
      %p112 = scmp.ne.s32.totalorder %s107, %s109
      %p113 = scmp.eq.s32.totalorder %s19, 0
      %p114 = por %p112, %p113
      %p115 = scmp.ne.s32.totalorder %s107, %s109
      %p116 = scmp.eq.s32.totalorder %s24, 1
      %p117 = por %p115, %p116
      %p118 = scmp.ne.s32.totalorder %s109, %s110
      %p119 = scmp.eq.s32.totalorder %s24, 0
      %p120 = por %p118, %p119
      %p121 = scmp.ne.s32.totalorder %s109, %s110
      %p122 = scmp.eq.s32.totalorder %s25, 1
      %p123 = por %p121, %p122
      %p125 = scmp.ne.s32.totalorder %s110, %s124
      %p126 = scmp.eq.s32.totalorder %s25, 0
      %p127 = por %p125, %p126
      %s129 = sadd.s32 %s128, 1
      %p132 = scmp.eq.s32.totalorder %s19, 1
      %p133 = scmp.ne.s32.totalorder %s128, %s130
      %p134 = scmp.eq.s32.totalorder %s19, 0
      %p135 = por %p133, %p134
      %p136 = scmp.ne.s32.totalorder %s128, %s130
      %p137 = scmp.eq.s32.totalorder %s24, 1
      %p138 = por %p136, %p137
      %p139 = scmp.ne.s32.totalorder %s130, %s131
      %p140 = scmp.eq.s32.totalorder %s24, 0
      %p141 = por %p139, %p140
      %p142 = scmp.ne.s32.totalorder %s130, %s131
      %p143 = scmp.eq.s32.totalorder %s25, 1
      %p144 = por %p142, %p143
      %p146 = scmp.ne.s32.totalorder %s131, %s145
      %p147 = scmp.eq.s32.totalorder %s25, 0
      %p148 = por %p146, %p147
      %s149 = ssub.s32 %s26, %s38
      %s150 = ssub.s32 %s27, %s34
      %s151 = sor.u32 %s149, %s150
      %p152 = scmp.eq.s32.totalorder %s151, 0
      %s154 = sadd.s32 %s153, 1
      %s155 = scalar_select %p152, %s153, %s154
      %p158 = pneg %p152
      %p159 = scmp.eq.s32.totalorder %s19, 1
      %p160 = por %p158, %p159
      %p161 = scmp.ne.s32.totalorder %s153, %s156
      %p162 = scmp.eq.s32.totalorder %s19, 0
      %p163 = por %p161, %p162
      %p164 = scmp.ne.s32.totalorder %s153, %s156
      %p165 = scmp.eq.s32.totalorder %s24, 1
      %p166 = por %p164, %p165
      %p167 = scmp.ne.s32.totalorder %s156, %s157
      %p168 = scmp.eq.s32.totalorder %s24, 0
      %p169 = por %p167, %p168
      %p170 = scmp.ne.s32.totalorder %s156, %s157
      %p171 = scmp.eq.s32.totalorder %s25, 1
      %p172 = por %p170, %p171
      %p174 = scmp.ne.s32.totalorder %s157, %s173
      %p175 = scmp.eq.s32.totalorder %s25, 0
      %p176 = por %p174, %p175
      %p177 = scmp.le.s32.totalorder 1, %s19
      %p178 = scmp.lt.s32.totalorder %s19, 3
      %p179 = pnand %p177, %p178
      %p180 = pneg %p179
      // Predicated region
      $region9: #{tpu_custom_call.1} parent=5 // pred_check
        _
      $region10: #{tpu_custom_call.1} parent=5 // pred_check_branch
        %182 = sbr.rel (%p179) target = $region12
      $region11: #{tpu_custom_call.1} parent=5 // pred_region
        %s183 = ssub.s32 %s19, 1
        // Predicated region
        $region13: #{tpu_custom_call.1} parent=11 // pred_check
          %p184 = pneg %p78
        $region14: #{tpu_custom_call.1} parent=11 // pred_check_branch
          %186 = sbr.rel (%p184) target = $region16
        $region15: #{tpu_custom_call.1} parent=11 // pred_region
          %188 = vsyncadd [#allocation9], 0
          %s189 = sshll.u32 %s1, 4
          %s190 = int_to_ptr.hbm [resolvable:$true] %s189
          %s191 = sshll.u32 [#allocation8], 4
          %s192 = int_to_ptr.vmem [resolvable:$true] %s191
          %197 = dma.hbm_to_vmem [thread:$0]  %s190, 3072, %s192, [#allocation9], 192, 192, 12
        $region16: #{tpu_custom_call.1} parent=11 // pred_fallthru
          _
        // Predicated region
        $region17: #{tpu_custom_call.1} parent=11 // pred_check
          %p198 = pneg %p99
        $region18: #{tpu_custom_call.1} parent=11 // pred_check_branch
          %200 = sbr.rel (%p198) target = $region20
        $region19: #{tpu_custom_call.1} parent=11 // pred_region
          %202 = vsyncadd [#allocation9], 0
          %s204 = sshll.u32 %s2, 4
          %s205 = int_to_ptr.hbm [resolvable:$true] %s204
          %s206 = sshll.u32 [#allocation10], 4
          %s207 = int_to_ptr.vmem [resolvable:$true] %s206
          %209 = dma.hbm_to_vmem [thread:$0]  %s205, 48, %s207, [#allocation9]
        $region20: #{tpu_custom_call.1} parent=11 // pred_fallthru
          _
        // Predicated region
        $region21: #{tpu_custom_call.1} parent=11 // pred_check
          %p210 = pneg %p120
        $region22: #{tpu_custom_call.1} parent=11 // pred_check_branch
          %212 = sbr.rel (%p210) target = $region24
        $region23: #{tpu_custom_call.1} parent=11 // pred_region
          %214 = vsyncadd [#allocation12], 0
          %s215 = sshll.u32 %s3, 4
          %s216 = int_to_ptr.hbm [resolvable:$true] %s215
          %s217 = sshll.u32 [#allocation11], 4
          %s218 = int_to_ptr.vmem [resolvable:$true] %s217
          %223 = dma.hbm_to_vmem [thread:$0]  %s216, 1024, %s218, [#allocation12], 64, 64, 4
        $region24: #{tpu_custom_call.1} parent=11 // pred_fallthru
          _
        // Predicated region
        $region25: #{tpu_custom_call.1} parent=11 // pred_check
          %p224 = pneg %p141
        $region26: #{tpu_custom_call.1} parent=11 // pred_check_branch
          %226 = sbr.rel (%p224) target = $region28
        $region27: #{tpu_custom_call.1} parent=11 // pred_region
          _
        $region28: #{tpu_custom_call.1} parent=11 // pred_fallthru
          _
      $region12: #{tpu_custom_call.1} parent=5 // pred_fallthru
        _
      %p227 = scmp.lt.s32.totalorder %s19, 2
      // Predicated region
      $region29: #{tpu_custom_call.1} parent=5 // pred_check
        %p228 = pneg %p227
      $region30: #{tpu_custom_call.1} parent=5 // pred_check_branch
        %230 = sbr.rel (%p228) target = $region32
      $region31: #{tpu_custom_call.1} parent=5 // pred_region
        // Predicated region
        $region33: #{tpu_custom_call.1} parent=31 // pred_check
          %p231 = pneg %p51
        $region34: #{tpu_custom_call.1} parent=31 // pred_check_branch
          %233 = sbr.rel (%p231) target = $region36
        $region35: #{tpu_custom_call.1} parent=31 // pred_region
          %s234 = sand.u32 %s41, 1
          %s235 = scalar_lea.sflag [#allocation6], %s234
          %s236 = sand.u32 %s41, 1
          %s237 = smul.addr %s236, 4
          %s238 = scalar_lea.vmem [#allocation5], %s237
          %240 = vsyncadd %s235, 0
          %s241 = smul.addr %s26, 4
          %s242 = scalar_lea.hbm %s0, %s241
          %s244 = sshll.u32 %s242, 4
          %s245 = int_to_ptr.hbm [resolvable:$true] %s244
          %s246 = sshll.u32 %s238, 4
          %s247 = int_to_ptr.vmem [resolvable:$true] %s246
          %249 = dma.hbm_to_vmem [thread:$0]  %s245, 64, %s247, %s235
        $region36: #{tpu_custom_call.1} parent=31 // pred_fallthru
          _
      $region32: #{tpu_custom_call.1} parent=5 // pred_fallthru
        _
      %p250 = scmp.le.s32.totalorder 1, %s19
      %p251 = scmp.lt.s32.totalorder %s19, 3
      %p252 = pnand %p250, %p251
      %p253 = pneg %p252
      // Predicated region
      $region37: #{tpu_custom_call.1} parent=5 // pred_check
        _
      $region38: #{tpu_custom_call.1} parent=5 // pred_check_branch
        %255 = sbr.rel (%p252) target = $region40
      $region39: #{tpu_custom_call.1} parent=5 // pred_region
        %s256 = ssub.s32 %s19, 1
        %s257 = sand.u32 %s44, 1
        %s258 = scalar_lea.sflag [#allocation6], %s257
        %s259 = sand.u32 %s44, 1
        %s260 = smul.addr %s259, 4
        %s261 = scalar_lea.vmem [#allocation5], %s260
        // Predicated region
        $region41: #{tpu_custom_call.1} parent=39 // pred_check
          %p262 = pneg %p57
        $region42: #{tpu_custom_call.1} parent=39 // pred_check_branch
          %264 = sbr.rel (%p262) target = $region44
        $region43: #{tpu_custom_call.1} parent=39 // pred_region
          %266 = dma.done %s258, 64
        $region44: #{tpu_custom_call.1} parent=39 // pred_fallthru
          _
        // Predicated region
        $region45: #{tpu_custom_call.1} parent=39 // pred_check
          %p267 = pneg %p78
        $region46: #{tpu_custom_call.1} parent=39 // pred_check_branch
          %269 = sbr.rel (%p267) target = $region48
        $region47: #{tpu_custom_call.1} parent=39 // pred_region
          %271 = dma.done [#allocation9], 3072
        $region48: #{tpu_custom_call.1} parent=39 // pred_fallthru
          _
        // Predicated region
        $region49: #{tpu_custom_call.1} parent=39 // pred_check
          %p272 = pneg %p99
        $region50: #{tpu_custom_call.1} parent=39 // pred_check_branch
          %274 = sbr.rel (%p272) target = $region52
        $region51: #{tpu_custom_call.1} parent=39 // pred_region
          %276 = dma.done [#allocation9], 48
        $region52: #{tpu_custom_call.1} parent=39 // pred_fallthru
          _
        // Predicated region
        $region53: #{tpu_custom_call.1} parent=39 // pred_check
          %p277 = pneg %p120
        $region54: #{tpu_custom_call.1} parent=39 // pred_check_branch
          %279 = sbr.rel (%p277) target = $region56
        $region55: #{tpu_custom_call.1} parent=39 // pred_region
          %281 = dma.done [#allocation12], 1024
        $region56: #{tpu_custom_call.1} parent=39 // pred_fallthru
          _
        %s282 = sand.u32 %s44, 1
        %s283 = scalar_lea.sflag [#allocation6], %s282
        %s284 = sand.u32 %s44, 1
        %s285 = smul.addr %s284, 4
        %s286 = scalar_lea.vmem [#allocation5], %s285
        %p287 = pneg %p57
        %p288 = pneg %p54
        %p289 = pneg %p78
        %p290 = pneg %p75
        %p291 = pneg %p99
        %p292 = pneg %p96
        %p293 = pneg %p120
        %p294 = pneg %p117
        %p295 = pneg %p141
        %p296 = pneg %p138
        %p297 = pneg %p169
        %p298 = pneg %p166
        %s299 = sand.u32 %s156, 1
        %s300 = scalar_lea.sflag [#allocation7], %s299
        %s301 = sand.u32 %s156, 1
        %s302 = smul.addr %s301, 8
        %s303 = scalar_lea.vmem [#allocation13], %s302
        %p305 = scmp.eq.s32.totalorder %s29, 0
        // Predicated region
        $region57: #{tpu_custom_call.1} parent=39 // pred_check
          %p306 = pneg %p305
        $region58: #{tpu_custom_call.1} parent=39 // pred_check_branch
          %308 = sbr.rel (%p306) target = $region60
        $region59: #{tpu_custom_call.1} parent=39 // pred_region
          %v309 = vld [vmem:[%s261] sm:$0xf]
          %v310 = vld [vmem:[#allocation8 + $0x4] sm:$0xf]
          %v311 = vld [vmem:[#allocation8 + $0x10] sm:$0xf]
          %v312 = vld [vmem:[#allocation8 + $0x1c] sm:$0xf]
          %v313 = vld [vmem:[#allocation8 + $0x28] sm:$0xf]
          %v314 = vld [vmem:[#allocation8 + $0x34] sm:$0xf]
          %v315 = vld [vmem:[#allocation8 + $0x40] sm:$0xf]
          %v316 = vld [vmem:[#allocation8 + $0x4c] sm:$0xf]
          %v317 = vld [vmem:[#allocation8 + $0x58] sm:$0xf]
          %v318 = vld [vmem:[#allocation8 + $0x64] sm:$0xf]
          %v319 = vld [vmem:[#allocation8 + $0x70] sm:$0xf]
          %v320 = vld [vmem:[#allocation8 + $0x7c] sm:$0xf]
          %v321 = vld [vmem:[#allocation8 + $0x88] sm:$0xf]
          %v322 = vld [vmem:[#allocation8 + $0x94] sm:$0xf]
          %v323 = vld [vmem:[#allocation8 + $0xa0] sm:$0xf]
          %v324 = vld [vmem:[#allocation8 + $0xac] sm:$0xf]
          %v325 = vld [vmem:[#allocation8 + $0xb8] sm:$0xf]
          %v326 = vld [vmem:[#allocation10 + $0x1] sm:$0x1]
          %v328 = vperm.slane %v326, 0
          %v346 = vunpack.c.l.b16 %v310
          %v347 = vunpack.c.l.b16 %v311
          %v348 = vunpack.c.l.b16 %v312
          %v349 = vunpack.c.l.b16 %v313
          %v350 = vunpack.c.l.b16 %v314
          %v351 = vunpack.c.l.b16 %v315
          %v352 = vunpack.c.l.b16 %v316
          %v353 = vunpack.c.l.b16 %v317
          %v354 = vunpack.c.l.b16 %v318
          %v355 = vunpack.c.l.b16 %v319
          %v356 = vunpack.c.l.b16 %v320
          %v357 = vunpack.c.l.b16 %v321
          %v358 = vunpack.c.l.b16 %v322
          %v359 = vunpack.c.l.b16 %v323
          %v360 = vunpack.c.l.b16 %v324
          %v361 = vunpack.c.l.b16 %v325
          %v362 = vpack.c.b16 %v347, %v346
          %v363 = vpack.c.b16 %v349, %v348
          %v364 = vpack.c.b16 %v351, %v350
          %v365 = vpack.c.b16 %v353, %v352
          %v366 = vpack.c.b16 %v355, %v354
          %v367 = vpack.c.b16 %v357, %v356
          %v368 = vpack.c.b16 %v359, %v358
          %v369 = vpack.c.b16 %v361, %v360
          %378 = vmatpush.bf16.msra.mxu0 %v369
          %379 = vmatpush.bf16.msra.mxu0 %v368
          %380 = vmatpush.bf16.msra.mxu0 %v367
          %381 = vmatpush.bf16.msra.mxu0 %v366
          %382 = vmatpush.bf16.msra.mxu0 %v365
          %383 = vmatpush.bf16.msra.mxu0 %v364
          %384 = vmatpush.bf16.msra.mxu0 %v363
          %385 = vmatpush.bf16.msra.mxu0 %v362
          %386 = vmatmul.bf16.gmra.mxu0 %v309
          %v387 = vpop.f32.mrf.mxu0
          %v388 = vadd.f32 %v328, %v387
          %v389 = vpop.f32.mrf.mxu0
          %390 = vdwg.mxu0
          %v391 = vpack.c.bf16 %v388, %v388
          %392 = vst [vmem:[#allocation2] sm:$0xf] %v391
          %v393 = vld [vmem:[#allocation8 + $0x8] sm:$0xf]
          %v394 = vld [vmem:[#allocation8 + $0x14] sm:$0xf]
          %v395 = vld [vmem:[#allocation8 + $0x20] sm:$0xf]
          %v396 = vld [vmem:[#allocation8 + $0x2c] sm:$0xf]
          %v397 = vld [vmem:[#allocation8 + $0x38] sm:$0xf]
          %v398 = vld [vmem:[#allocation8 + $0x44] sm:$0xf]
          %v399 = vld [vmem:[#allocation8 + $0x50] sm:$0xf]
          %v400 = vld [vmem:[#allocation8 + $0x5c] sm:$0xf]
          %v401 = vld [vmem:[#allocation8 + $0x68] sm:$0xf]
          %v402 = vld [vmem:[#allocation8 + $0x74] sm:$0xf]
          %v403 = vld [vmem:[#allocation8 + $0x80] sm:$0xf]
          %v404 = vld [vmem:[#allocation8 + $0x8c] sm:$0xf]
          %v405 = vld [vmem:[#allocation8 + $0x98] sm:$0xf]
          %v406 = vld [vmem:[#allocation8 + $0xa4] sm:$0xf]
          %v407 = vld [vmem:[#allocation8 + $0xb0] sm:$0xf]
          %v408 = vld [vmem:[#allocation8 + $0xbc] sm:$0xf]
          %v409 = vld [vmem:[#allocation10 + $0x2] sm:$0x1]
          %v411 = vperm.slane %v409, 0
          %v429 = vunpack.c.l.b16 %v393
          %v430 = vunpack.c.l.b16 %v394
          %v431 = vunpack.c.l.b16 %v395
          %v432 = vunpack.c.l.b16 %v396
          %v433 = vunpack.c.l.b16 %v397
          %v434 = vunpack.c.l.b16 %v398
          %v435 = vunpack.c.l.b16 %v399
          %v436 = vunpack.c.l.b16 %v400
          %v437 = vunpack.c.l.b16 %v401
          %v438 = vunpack.c.l.b16 %v402
          %v439 = vunpack.c.l.b16 %v403
          %v440 = vunpack.c.l.b16 %v404
          %v441 = vunpack.c.l.b16 %v405
          %v442 = vunpack.c.l.b16 %v406
          %v443 = vunpack.c.l.b16 %v407
          %v444 = vunpack.c.l.b16 %v408
          %v445 = vpack.c.b16 %v430, %v429
          %v446 = vpack.c.b16 %v432, %v431
          %v447 = vpack.c.b16 %v434, %v433
          %v448 = vpack.c.b16 %v436, %v435
          %v449 = vpack.c.b16 %v438, %v437
          %v450 = vpack.c.b16 %v440, %v439
          %v451 = vpack.c.b16 %v442, %v441
          %v452 = vpack.c.b16 %v444, %v443
          %461 = vmatpush.bf16.msra.mxu0 %v452
          %462 = vmatpush.bf16.msra.mxu0 %v451
          %463 = vmatpush.bf16.msra.mxu0 %v450
          %464 = vmatpush.bf16.msra.mxu0 %v449
          %465 = vmatpush.bf16.msra.mxu0 %v448
          %466 = vmatpush.bf16.msra.mxu0 %v447
          %467 = vmatpush.bf16.msra.mxu0 %v446
          %468 = vmatpush.bf16.msra.mxu0 %v445
          %469 = vmatmul.bf16.gmra.mxu0 %v309
          %v470 = vpop.f32.mrf.mxu0
          %v471 = vadd.f32 %v411, %v470
          %v472 = vpop.f32.mrf.mxu0
          %473 = vdwg.mxu0
          %v474 = vpack.c.bf16 %v471, %v471
          %475 = vst [vmem:[#allocation3] sm:$0xf] %v474
        $region60: #{tpu_custom_call.1} parent=39 // pred_fallthru
          _
        %s476 = smul.u32 %s29, 8
        %s477 = sshra.s32 %s476, 3
        %s478 = sand.u32 %s476, 7
        %s479 = smul.addr %s477, 4
        %s480 = scalar_lea.vmem %s261, %s479 [#allocation5]
        %v481 = vld [vmem:[%s480] sm:$0xf]
        %v482 = vld [vmem:[#allocation8] sm:$0xf]
        %v483 = vld [vmem:[#allocation8 + $0xc] sm:$0xf]
        %v484 = vld [vmem:[#allocation8 + $0x18] sm:$0xf]
        %v485 = vld [vmem:[#allocation8 + $0x24] sm:$0xf]
        %v486 = vld [vmem:[#allocation8 + $0x30] sm:$0xf]
        %v487 = vld [vmem:[#allocation8 + $0x3c] sm:$0xf]
        %v488 = vld [vmem:[#allocation8 + $0x48] sm:$0xf]
        %v489 = vld [vmem:[#allocation8 + $0x54] sm:$0xf]
        %v490 = vld [vmem:[#allocation8 + $0x60] sm:$0xf]
        %v491 = vld [vmem:[#allocation8 + $0x6c] sm:$0xf]
        %v492 = vld [vmem:[#allocation8 + $0x78] sm:$0xf]
        %v493 = vld [vmem:[#allocation8 + $0x84] sm:$0xf]
        %v494 = vld [vmem:[#allocation8 + $0x90] sm:$0xf]
        %v495 = vld [vmem:[#allocation8 + $0x9c] sm:$0xf]
        %v496 = vld [vmem:[#allocation8 + $0xa8] sm:$0xf]
        %v497 = vld [vmem:[#allocation8 + $0xb4] sm:$0xf]
        %v498 = vld [vmem:[#allocation10] sm:$0x1]
        %v500 = vperm.slane %v498, 0
        %v518 = vunpack.c.l.b16 %v482
        %v519 = vunpack.c.l.b16 %v483
        %v520 = vunpack.c.l.b16 %v484
        %v521 = vunpack.c.l.b16 %v485
        %v522 = vunpack.c.l.b16 %v486
        %v523 = vunpack.c.l.b16 %v487
        %v524 = vunpack.c.l.b16 %v488
        %v525 = vunpack.c.l.b16 %v489
        %v526 = vunpack.c.l.b16 %v490
        %v527 = vunpack.c.l.b16 %v491
        %v528 = vunpack.c.l.b16 %v492
        %v529 = vunpack.c.l.b16 %v493
        %v530 = vunpack.c.l.b16 %v494
        %v531 = vunpack.c.l.b16 %v495
        %v532 = vunpack.c.l.b16 %v496
        %v533 = vunpack.c.l.b16 %v497
        %v534 = vpack.c.b16 %v519, %v518
        %v535 = vpack.c.b16 %v521, %v520
        %v536 = vpack.c.b16 %v523, %v522
        %v537 = vpack.c.b16 %v525, %v524
        %v538 = vpack.c.b16 %v527, %v526
        %v539 = vpack.c.b16 %v529, %v528
        %v540 = vpack.c.b16 %v531, %v530
        %v541 = vpack.c.b16 %v533, %v532
        %550 = vmatpush.bf16.msra.mxu0 %v541
        %551 = vmatpush.bf16.msra.mxu0 %v540
        %552 = vmatpush.bf16.msra.mxu0 %v539
        %553 = vmatpush.bf16.msra.mxu0 %v538
        %554 = vmatpush.bf16.msra.mxu0 %v537
        %555 = vmatpush.bf16.msra.mxu0 %v536
        %556 = vmatpush.bf16.msra.mxu0 %v535
        %557 = vmatpush.bf16.msra.mxu0 %v534
        %558 = vmatmul.bf16.gmra.mxu0 %v481
        %v559 = vpop.f32.mrf.mxu0
        %v560 = vadd.f32 %v500, %v559
        %v561 = vpop.f32.mrf.mxu0
        %562 = vdwg.mxu0
        %v563 = vpack.c.bf16 %v560, %v560
        %v564 = vld [vmem:[#allocation2] sm:$0xf]
        %v565 = vld [vmem:[#allocation3] sm:$0xf]
        %vm566 = vcmask 261120
        %v568 = vsel %vm566, %v563, 0
        %v571 = vsel %vm566, %v564, 0
        %573 = vmatpush.bf16.xpose.msra.mxu0 0
        %574 = vmatpush.bf16.xpose.msra.mxu0 0
        %575 = vmatpush.bf16.xpose.msra.mxu0 0
        %576 = vmatpush.bf16.xpose.msra.mxu0 0
        %577 = vmatpush.bf16.xpose.msra.mxu0 0
        %578 = vmatpush.bf16.xpose.msra.mxu0 0
        %579 = vmatpush.bf16.xpose.msra.mxu0 0
        %580 = vmatpush.bf16.xpose.msra.mxu0 %v571
        %581 = vmatmul.bf16.gmra.mxu0 %v568
        %v582 = vpop.f32.mrf.mxu0
        %v583 = vadd.f32 0.0, %v582
        %v584 = vpop.f32.mrf.mxu0
        %585 = vdwg.mxu0
        %vm586 = vcmask 64512
        %v587 = vsel %vm586, %v583, -inf
        %588 = vmax.xlane.f32.xlu0 %v587
        %v589 = vpop.xlane.xlu0 %588
        %v590 = vsub.f32 %v583, %v589
        %v591 = vmul.f32 %v590, 1.442695
        %v592 = vpow.pop %v591
        %v593 = vsel %vm586, %v592, 0.0
        %594 = vadd.xlane.f32.xlu0 %v593
        %v595 = vpop.xlane.xlu0 %594
        %v596 = vpack.c.bf16 %v592, %v592
        %v598 = vsel %vm586, %v596, 0
        %vm600 = vcmask 1043456
        %v602 = vsel %vm600, %v565, 0
        %604 = vmatpush.bf16.msra.mxu0 0
        %605 = vmatpush.bf16.msra.mxu0 0
        %606 = vmatpush.bf16.msra.mxu0 0
        %607 = vmatpush.bf16.msra.mxu0 0
        %608 = vmatpush.bf16.msra.mxu0 0
        %609 = vmatpush.bf16.msra.mxu0 0
        %610 = vmatpush.bf16.msra.mxu0 0
        %611 = vmatpush.bf16.msra.mxu0 %v602
        %612 = vmatmul.bf16.gmra.mxu0 %v598
        %v613 = vpop.f32.mrf.mxu0
        %v614 = vadd.f32 0.0, %v613
        %v615 = vpop.f32.mrf.mxu0
        %616 = vdwg.mxu0
        %v617 = vrcp.pop %v595
        %v618 = vmul.f32 %v614, %v617
        %v619 = vpack.c.bf16 %v618, %v618
        %vm620 = vcmask 257024
        %621 = vst.msk [vmem:[#allocation4] sm:$0xf] %vm620, %v619
        %v622 = vld [vmem:[#allocation2] sm:$0xf]
        %v623 = vld [vmem:[#allocation3] sm:$0xf]
        %v625 = vunpack.c.l.b16 %v563
        %v626 = vpack.c.b16 %v625, %v625
        %627 = vrot.lane.b32.xlu0 %v626, 96
        %v628 = vpop.permute.xlu0 %627
        %v630 = vunpack.c.l.b16 %v622
        %v631 = vpack.c.b16 %v630, %v630
        %632 = vrot.lane.b32.xlu0 %v631, 96
        %v633 = vpop.permute.xlu0 %632
        %v635 = vsel %vm566, %v628, 0
        %v638 = vsel %vm566, %v633, 0
        %640 = vmatpush.bf16.xpose.msra.mxu0 0
        %641 = vmatpush.bf16.xpose.msra.mxu0 0
        %642 = vmatpush.bf16.xpose.msra.mxu0 0
        %643 = vmatpush.bf16.xpose.msra.mxu0 0
        %644 = vmatpush.bf16.xpose.msra.mxu0 0
        %645 = vmatpush.bf16.xpose.msra.mxu0 0
        %646 = vmatpush.bf16.xpose.msra.mxu0 0
        %647 = vmatpush.bf16.xpose.msra.mxu0 %v638
        %648 = vmatmul.bf16.gmra.mxu0 %v635
        %v649 = vpop.f32.mrf.mxu0
        %v650 = vadd.f32 0.0, %v649
        %v651 = vpop.f32.mrf.mxu0
        %652 = vdwg.mxu0
        %v653 = vsel %vm586, %v650, -inf
        %654 = vmax.xlane.f32.xlu0 %v653
        %v655 = vpop.xlane.xlu0 %654
        %v656 = vsub.f32 %v650, %v655
        %v657 = vmul.f32 %v656, 1.442695
        %v658 = vpow.pop %v657
        %v659 = vsel %vm586, %v658, 0.0
        %660 = vadd.xlane.f32.xlu0 %v659
        %v661 = vpop.xlane.xlu0 %660
        %v662 = vpack.c.bf16 %v658, %v658
        %v664 = vunpack.c.l.b16 %v623
        %v665 = vpack.c.b16 %v664, %v664
        %666 = vrot.lane.b32.xlu0 %v665, 96
        %v667 = vpop.permute.xlu0 %666
        %v669 = vsel %vm586, %v662, 0
        %v672 = vsel %vm600, %v667, 0
        %674 = vmatpush.bf16.msra.mxu0 0
        %675 = vmatpush.bf16.msra.mxu0 0
        %676 = vmatpush.bf16.msra.mxu0 0
        %677 = vmatpush.bf16.msra.mxu0 0
        %678 = vmatpush.bf16.msra.mxu0 0
        %679 = vmatpush.bf16.msra.mxu0 0
        %680 = vmatpush.bf16.msra.mxu0 0
        %681 = vmatpush.bf16.msra.mxu0 %v672
        %682 = vmatmul.bf16.gmra.mxu0 %v669
        %v683 = vpop.f32.mrf.mxu0
        %v684 = vadd.f32 0.0, %v683
        %v685 = vpop.f32.mrf.mxu0
        %686 = vdwg.mxu0
        %v687 = vrcp.pop %v661
        %v688 = vmul.f32 %v684, %v687
        %v689 = vpack.c.bf16 %v688, %v688
        %691 = vrot.lane.b32.xlu0 %v689, 32
        %v692 = vpop.permute.xlu0 %691
        %vm694 = vcmask 519424
        %695 = vst.msk [vmem:[#allocation4] sm:$0xf] %vm694, %v692
        %v696 = vld [vmem:[#allocation2] sm:$0xf]
        %v697 = vld [vmem:[#allocation3] sm:$0xf]
        %698 = vrot.lane.b32.xlu0 %v626, 64
        %v699 = vpop.permute.xlu0 %698
        %v701 = vunpack.c.l.b16 %v696
        %v702 = vpack.c.b16 %v701, %v701
        %703 = vrot.lane.b32.xlu0 %v702, 64
        %v704 = vpop.permute.xlu0 %703
        %v706 = vsel %vm566, %v699, 0
        %v709 = vsel %vm566, %v704, 0
        %711 = vmatpush.bf16.xpose.msra.mxu0 0
        %712 = vmatpush.bf16.xpose.msra.mxu0 0
        %713 = vmatpush.bf16.xpose.msra.mxu0 0
        %714 = vmatpush.bf16.xpose.msra.mxu0 0
        %715 = vmatpush.bf16.xpose.msra.mxu0 0
        %716 = vmatpush.bf16.xpose.msra.mxu0 0
        %717 = vmatpush.bf16.xpose.msra.mxu0 0
        %718 = vmatpush.bf16.xpose.msra.mxu0 %v709
        %719 = vmatmul.bf16.gmra.mxu0 %v706
        %v720 = vpop.f32.mrf.mxu0
        %v721 = vadd.f32 0.0, %v720
        %v722 = vpop.f32.mrf.mxu0
        %723 = vdwg.mxu0
        %v724 = vsel %vm586, %v721, -inf
        %725 = vmax.xlane.f32.xlu0 %v724
        %v726 = vpop.xlane.xlu0 %725
        %v727 = vsub.f32 %v721, %v726
        %v728 = vmul.f32 %v727, 1.442695
        %v729 = vpow.pop %v728
        %v730 = vsel %vm586, %v729, 0.0
        %731 = vadd.xlane.f32.xlu0 %v730
        %v732 = vpop.xlane.xlu0 %731
        %v733 = vpack.c.bf16 %v729, %v729
        %v735 = vunpack.c.l.b16 %v697
        %v736 = vpack.c.b16 %v735, %v735
        %737 = vrot.lane.b32.xlu0 %v736, 64
        %v738 = vpop.permute.xlu0 %737
        %v740 = vsel %vm586, %v733, 0
        %v743 = vsel %vm600, %v738, 0
        %745 = vmatpush.bf16.msra.mxu0 0
        %746 = vmatpush.bf16.msra.mxu0 0
        %747 = vmatpush.bf16.msra.mxu0 0
        %748 = vmatpush.bf16.msra.mxu0 0
        %749 = vmatpush.bf16.msra.mxu0 0
        %750 = vmatpush.bf16.msra.mxu0 0
        %751 = vmatpush.bf16.msra.mxu0 0
        %752 = vmatpush.bf16.msra.mxu0 %v743
        %753 = vmatmul.bf16.gmra.mxu0 %v740
        %v754 = vpop.f32.mrf.mxu0
        %v755 = vadd.f32 0.0, %v754
        %v756 = vpop.f32.mrf.mxu0
        %757 = vdwg.mxu0
        %v758 = vrcp.pop %v732
        %v759 = vmul.f32 %v755, %v758
        %v760 = vpack.c.bf16 %v759, %v759
        %762 = vrot.lane.b32.xlu0 %v760, 64
        %v763 = vpop.permute.xlu0 %762
        %vm765 = vcmask 781824
        %766 = vst.msk [vmem:[#allocation4] sm:$0xf] %vm765, %v763
        %v767 = vld [vmem:[#allocation2] sm:$0xf]
        %v768 = vld [vmem:[#allocation3] sm:$0xf]
        %769 = vrot.lane.b32.xlu0 %v626, 32
        %v770 = vpop.permute.xlu0 %769
        %v772 = vunpack.c.l.b16 %v767
        %v773 = vpack.c.b16 %v772, %v772
        %774 = vrot.lane.b32.xlu0 %v773, 32
        %v775 = vpop.permute.xlu0 %774
        %v777 = vsel %vm566, %v770, 0
        %v780 = vsel %vm566, %v775, 0
        %782 = vmatpush.bf16.xpose.msra.mxu0 0
        %783 = vmatpush.bf16.xpose.msra.mxu0 0
        %784 = vmatpush.bf16.xpose.msra.mxu0 0
        %785 = vmatpush.bf16.xpose.msra.mxu0 0
        %786 = vmatpush.bf16.xpose.msra.mxu0 0
        %787 = vmatpush.bf16.xpose.msra.mxu0 0
        %788 = vmatpush.bf16.xpose.msra.mxu0 0
        %789 = vmatpush.bf16.xpose.msra.mxu0 %v780
        %790 = vmatmul.bf16.gmra.mxu0 %v777
        %v791 = vpop.f32.mrf.mxu0
        %v792 = vadd.f32 0.0, %v791
        %v793 = vpop.f32.mrf.mxu0
        %794 = vdwg.mxu0
        %v795 = vsel %vm586, %v792, -inf
        %796 = vmax.xlane.f32.xlu0 %v795
        %v797 = vpop.xlane.xlu0 %796
        %v798 = vsub.f32 %v792, %v797
        %v799 = vmul.f32 %v798, 1.442695
        %v800 = vpow.pop %v799
        %v801 = vsel %vm586, %v800, 0.0
        %802 = vadd.xlane.f32.xlu0 %v801
        %v803 = vpop.xlane.xlu0 %802
        %v804 = vpack.c.bf16 %v800, %v800
        %v806 = vunpack.c.l.b16 %v768
        %v807 = vpack.c.b16 %v806, %v806
        %808 = vrot.lane.b32.xlu0 %v807, 32
        %v809 = vpop.permute.xlu0 %808
        %v811 = vsel %vm586, %v804, 0
        %v814 = vsel %vm600, %v809, 0
        %816 = vmatpush.bf16.msra.mxu0 0
        %817 = vmatpush.bf16.msra.mxu0 0
        %818 = vmatpush.bf16.msra.mxu0 0
        %819 = vmatpush.bf16.msra.mxu0 0
        %820 = vmatpush.bf16.msra.mxu0 0
        %821 = vmatpush.bf16.msra.mxu0 0
        %822 = vmatpush.bf16.msra.mxu0 0
        %823 = vmatpush.bf16.msra.mxu0 %v814
        %824 = vmatmul.bf16.gmra.mxu0 %v811
        %v825 = vpop.f32.mrf.mxu0
        %v826 = vadd.f32 0.0, %v825
        %v827 = vpop.f32.mrf.mxu0
        %828 = vdwg.mxu0
        %v829 = vrcp.pop %v803
        %v830 = vmul.f32 %v826, %v829
        %v831 = vpack.c.bf16 %v830, %v830
        %833 = vrot.lane.b32.xlu0 %v831, 96
        %v834 = vpop.permute.xlu0 %833
        %vm836 = vcmask 1044224
        %837 = vst.msk [vmem:[#allocation4] sm:$0xf] %vm836, %v834
        %v838 = vld [vmem:[#allocation4] sm:$0xf]
        %v839 = vld [vmem:[#allocation11] sm:$0xf]
        %v840 = vld [vmem:[#allocation11 + $0x4] sm:$0xf]
        %v841 = vld [vmem:[#allocation11 + $0x8] sm:$0xf]
        %v842 = vld [vmem:[#allocation11 + $0xc] sm:$0xf]
        %v843 = vld [vmem:[#allocation11 + $0x10] sm:$0xf]
        %v844 = vld [vmem:[#allocation11 + $0x14] sm:$0xf]
        %v845 = vld [vmem:[#allocation11 + $0x18] sm:$0xf]
        %v846 = vld [vmem:[#allocation11 + $0x1c] sm:$0xf]
        %v847 = vld [vmem:[#allocation11 + $0x20] sm:$0xf]
        %v848 = vld [vmem:[#allocation11 + $0x24] sm:$0xf]
        %v849 = vld [vmem:[#allocation11 + $0x28] sm:$0xf]
        %v850 = vld [vmem:[#allocation11 + $0x2c] sm:$0xf]
        %v851 = vld [vmem:[#allocation11 + $0x30] sm:$0xf]
        %v852 = vld [vmem:[#allocation11 + $0x34] sm:$0xf]
        %v853 = vld [vmem:[#allocation11 + $0x38] sm:$0xf]
        %v854 = vld [vmem:[#allocation11 + $0x3c] sm:$0xf]
        %v855 = vld [vmem:[%s4] sm:$0x1]
        %v857 = vperm.slane %v855, 0
        %v875 = vunpack.c.l.b16 %v839
        %v876 = vunpack.c.l.b16 %v840
        %v877 = vunpack.c.l.b16 %v841
        %v878 = vunpack.c.l.b16 %v842
        %v879 = vunpack.c.l.b16 %v843
        %v880 = vunpack.c.l.b16 %v844
        %v881 = vunpack.c.l.b16 %v845
        %v882 = vunpack.c.l.b16 %v846
        %v883 = vunpack.c.l.b16 %v847
        %v884 = vunpack.c.l.b16 %v848
        %v885 = vunpack.c.l.b16 %v849
        %v886 = vunpack.c.l.b16 %v850
        %v887 = vunpack.c.l.b16 %v851
        %v888 = vunpack.c.l.b16 %v852
        %v889 = vunpack.c.l.b16 %v853
        %v890 = vunpack.c.l.b16 %v854
        %v891 = vpack.c.b16 %v876, %v875
        %v892 = vpack.c.b16 %v878, %v877
        %v893 = vpack.c.b16 %v880, %v879
        %v894 = vpack.c.b16 %v882, %v881
        %v895 = vpack.c.b16 %v884, %v883
        %v896 = vpack.c.b16 %v886, %v885
        %v897 = vpack.c.b16 %v888, %v887
        %v898 = vpack.c.b16 %v890, %v889
        %907 = vmatpush.bf16.msra.mxu0 %v898
        %908 = vmatpush.bf16.msra.mxu0 %v897
        %909 = vmatpush.bf16.msra.mxu0 %v896
        %910 = vmatpush.bf16.msra.mxu0 %v895
        %911 = vmatpush.bf16.msra.mxu0 %v894
        %912 = vmatpush.bf16.msra.mxu0 %v893
        %913 = vmatpush.bf16.msra.mxu0 %v892
        %914 = vmatpush.bf16.msra.mxu0 %v891
        %915 = vmatmul.bf16.gmra.mxu0 %v838
        %v916 = vpop.f32.mrf.mxu0
        %v917 = vadd.f32 %v857, %v916
        %v918 = vpop.f32.mrf.mxu0
        %919 = vdwg.mxu0
        %920 = vst [vmem:[%s303] sm:$0xff] %v917
        %s921 = sand.u32 %s156, 1
        %s922 = scalar_lea.sflag [#allocation7], %s921
        %s923 = sand.u32 %s156, 1
        %s924 = smul.addr %s923, 8
        %s925 = scalar_lea.vmem [#allocation13], %s924
        // Predicated region
        $region61: #{tpu_custom_call.1} parent=39 // pred_check
          %p926 = pneg %p166
        $region62: #{tpu_custom_call.1} parent=39 // pred_check_branch
          %928 = sbr.rel (%p926) target = $region64
        $region63: #{tpu_custom_call.1} parent=39 // pred_region
          %930 = vsyncadd %s922, 0
          %s931 = sadd.s32 %s29, %s28
          %s932 = smul.addr %s931, 8
          %s933 = scalar_lea.hbm %s5, %s932
          %s935 = sshll.u32 %s925, 4
          %s936 = int_to_ptr.vmem [resolvable:$true] %s935
          %s937 = sshll.u32 %s933, 4
          %s938 = int_to_ptr.hbm [resolvable:$true] %s937
          %940 = dma.vmem_to_hbm [thread:$0]  %s936, 128, %s938, %s922
        $region64: #{tpu_custom_call.1} parent=39 // pred_fallthru
          _
      $region40: #{tpu_custom_call.1} parent=5 // pred_fallthru
        _
      %p941 = scmp.le.s32.totalorder 2, %s19
      // Predicated region
      $region65: #{tpu_custom_call.1} parent=5 // pred_check
        %p942 = pneg %p941
      $region66: #{tpu_custom_call.1} parent=5 // pred_check_branch
        %944 = sbr.rel (%p942) target = $region68
      $region67: #{tpu_custom_call.1} parent=5 // pred_region
        %s945 = ssub.s32 %s19, 2
        // Predicated region
        $region69: #{tpu_custom_call.1} parent=67 // pred_check
          %p946 = pneg %p172
        $region70: #{tpu_custom_call.1} parent=67 // pred_check_branch
          %948 = sbr.rel (%p946) target = $region72
        $region71: #{tpu_custom_call.1} parent=67 // pred_region
          %s949 = sand.u32 %s157, 1
          %s950 = scalar_lea.sflag [#allocation7], %s949
          %s951 = sand.u32 %s157, 1
          %s952 = smul.addr %s951, 8
          %s953 = scalar_lea.vmem [#allocation13], %s952
          %955 = dma.done %s950, 128
        $region72: #{tpu_custom_call.1} parent=67 // pred_fallthru
          _
      $region68: #{tpu_custom_call.1} parent=5 // pred_fallthru
        _
    $region6: #{tpu_custom_call.1} parent=1 // loop_footer
      %s23 = sadd.s32 1, %s19
    $region7: #{tpu_custom_call.1} parent=1 // loop_footer_branch
      %18 = sbr.rel target = $region3
    $region8: #{tpu_custom_call.1} parent=1 // loop_exit
      _
    %956 = vsyncpa [#allocation6], 1
    %s957 = scalar_lea.sflag [#allocation6], 1
    %958 = vsyncpa %s957, 1
    %959 = vsyncpa [#allocation9], 1
    %960 = vsyncpa [#allocation12], 1
    %961 = vsyncpa [#allocation7], 1
    %s962 = scalar_lea.sflag [#allocation7], 1
    %963 = vsyncpa %s962, 1

</llo_original>
